<compile_context>
chip_gen: v7x
topology: tpu7x:2x2x1
jax: 0.10.0
libtpu: 0.0.40
codegen_flags: <defaults>
</compile_context>

<pallas_src>
import jax
import jax.numpy as jnp
from jax.experimental import pallas as pl
from jax.experimental.pallas import tpu as pltpu


MAX_VALUE = 512.0
LN_EPS = 1e-5
_INV_SQRT2 = 0.7071067811865476


def _round_up(a, b):
    return ((a + b - 1) // b) * b


def _gelu_exact(x):
    # PyTorch nn.GELU() default: 0.5 * x * (1 + erf(x / sqrt(2)))
    return 0.5 * x * (1.0 + jax.lax.erf(x * _INV_SQRT2))


def _make_kernel(packed: bool, mxu_bf16: bool, approx_gelu: bool):
    mm_dtype = jnp.bfloat16 if mxu_bf16 else jnp.float32

    def body(x_ref, w1_ref, b1_ref, w2_ref, b2_ref, g_ref, bt_ref,
             wa1_ref, ba1_ref, wa2_ref, ba2_ref, mm_ref, o_ref):
        x = jnp.minimum(x_ref[...], MAX_VALUE)                # clamp(max=512)

        # Linear(1 -> D).  Packed: P tokens folded onto the lane axis, small
        # K matmul against block-diag(w1).  Unpacked: pure VPU broadcast FMA.
        if packed:
            h = jnp.dot(x, w1_ref[...], preferred_element_type=jnp.float32)
        else:
            h = x * w1_ref[...]
        h = jnp.maximum(h + b1_ref[...], 0.0)                 # bias + ReLU

        # Linear(D -> D) on the MXU (block-diagonal when packed, bf16 fast path).
        h = jnp.dot(h.astype(mm_dtype), w2_ref[...],
                    preferred_element_type=jnp.float32) + b2_ref[...]

        # LayerNorm over each token's D features (f32 statistics).
        if packed:
            mm = mm_ref[...]            # block-diag(ones(D,D)/D): per-token mean
            mu = jnp.dot(h, mm, preferred_element_type=jnp.float32)
            xc = h - mu
            var = jnp.dot(xc * xc, mm, preferred_element_type=jnp.float32)
        else:
            mu = jnp.mean(h, axis=-1, keepdims=True)
            xc = h - mu
            var = jnp.mean(xc * xc, axis=-1, keepdims=True)
        h = xc * jax.lax.rsqrt(var + LN_EPS)
        h = h * g_ref[...] + bt_ref[...]

        # Adapter: fc1 -> GELU -> fc2, skip connection (TOKEN_FLAG=True path).
        a = jnp.dot(h.astype(mm_dtype), wa1_ref[...],
                    preferred_element_type=jnp.float32) + ba1_ref[...]
        a = jax.nn.gelu(a, approximate=True) if approx_gelu else _gelu_exact(a)
        a = jnp.dot(a.astype(mm_dtype), wa2_ref[...],
                    preferred_element_type=jnp.float32) + ba2_ref[...]
        h = h + a

        # Dropout(p=0.1) is the identity in eval mode.
        # TODO(synk): training-mode dropout (Bernoulli mask via pltpu.prng_*).
        o_ref[...] = h.astype(o_ref.dtype)

    if packed:
        def kernel(x_ref, w1_ref, b1_ref, w2_ref, b2_ref, g_ref, bt_ref,
                   wa1_ref, ba1_ref, wa2_ref, ba2_ref, mm_ref, o_ref):
            body(x_ref, w1_ref, b1_ref, w2_ref, b2_ref, g_ref, bt_ref,
                 wa1_ref, ba1_ref, wa2_ref, ba2_ref, mm_ref, o_ref)
    else:
        def kernel(x_ref, w1_ref, b1_ref, w2_ref, b2_ref, g_ref, bt_ref,
                   wa1_ref, ba1_ref, wa2_ref, ba2_ref, o_ref):
            body(x_ref, w1_ref, b1_ref, w2_ref, b2_ref, g_ref, bt_ref,
                 wa1_ref, ba1_ref, wa2_ref, ba2_ref, None, o_ref)
    return kernel


def _vmem_capacity_bytes():
    try:
        return int(pltpu.get_tpu_info().vmem_capacity_bytes)
    except Exception:
        return 64 * 1024 * 1024          # v7x-safe assumption


def _pick_tm(m_rows, out_row_bytes):
    # ~2 MiB output blocks (>= ~1 MiB reaches ~85% of HBM roofline); allow
    # ~4 MiB on generations with large physical VMEM (v5e/v6e: 128 MiB).
    target = (4 << 20) if _vmem_capacity_bytes() >= (96 << 20) else (2 << 20)
    tm = _round_up(max(1, target // max(out_row_bytes, 1)), 8)
    tm = max(512, min(tm, 8192))
    # Guarantee >= 2 grid steps so ("parallel",) can use both v7x TensorCores.
    if m_rows > 8:
        tm = min(tm, _round_up(pl.cdiv(m_rows, 2), 8))
    # A single full-extent block is allowed even when m_rows is not 8-aligned.
    if tm >= m_rows:
        tm = m_rows
    return max(tm, 1)


def continuous_value_encoder(
    x,
    params,
    *,
    out_dtype=jnp.bfloat16,   # fast path: halves HBM write traffic (store-bound)
    mxu_bf16=True,            # bf16 MXU inputs for linear2 / adapter matmuls
    approx_gelu=False,        # tanh GELU on the EUP instead of exact erf (VALU)
    pack_lanes=None,          # fold 128 // D tokens per lane row when D < 128
    tm=None,                  # row-tile override
):
    """x: [B, S] float -> [B, S, d_model] in out_dtype (eval-mode forward)."""
    B, S = x.shape
    D = params["w1"].shape[1]
    M = B * S
    f32 = jnp.float32
    mm_dtype = jnp.bfloat16 if mxu_bf16 else f32

    if pack_lanes is None:
        pack_lanes = (D < 128) and (128 % D == 0)
    P = max(1, 128 // D) if pack_lanes else 1
    packed = P > 1

    # ---- token rows ---------------------------------------------------------
    x_flat = x.reshape(M).astype(f32)
    if packed:
        m_pad = _round_up(M, P)
        if m_pad != M:
            # TODO(synk): this tiny (< P rows) pad and the matching out[:M]
            # slice below are the only extra output copy left; they trigger
            # only when M % P != 0.
            x_flat = jnp.pad(x_flat, (0, m_pad - M))
        x_rows = x_flat.reshape(m_pad // P, P)
        if P < 8:                        # align the tiny contraction dim to 8
            x_rows = jnp.pad(x_rows, ((0, 0), (0, 8 - P)))
    else:
        m_pad = M
        x_rows = x_flat.reshape(M, 1)
    m_rows, x_w = x_rows.shape
    d_eff = P * D

    # ---- weights: packed / cast once per call (precompute in production) ----
    w1, b1 = params["w1"].astype(f32), params["b1"].astype(f32)
    w2, b2 = params["w2"].astype(f32), params["b2"].astype(f32)
    gamma, beta = params["gamma"].astype(f32), params["beta"].astype(f32)
    wa1, ba1 = params["wa1"].astype(f32), params["ba1"].astype(f32)
    wa2, ba2 = params["wa2"].astype(f32), params["ba2"].astype(f32)
    if packed:
        eye = jnp.eye(P, dtype=f32)
        blockdiag = lambda a: jnp.kron(eye, a)
        tile = lambda v: jnp.tile(v, (1, P))
        w1, w2, wa1, wa2 = map(blockdiag, (w1, w2, wa1, wa2))
        b1, b2, gamma, beta, ba1, ba2 = map(tile, (b1, b2, gamma, beta, ba1, ba2))
        if P < 8:
            w1 = jnp.pad(w1, ((0, 8 - P), (0, 0)))   # matches padded x columns
        mmean = blockdiag(jnp.full((D, D), 1.0 / D, f32))  # per-token LN mean
    w2, wa1, wa2 = (w.astype(mm_dtype) for w in (w2, wa1, wa2))

    weight_ops = [w1, b1, w2, b2, gamma, beta, wa1, ba1, wa2, ba2]
    if packed:
        weight_ops.append(mmean)

    # ---- tiling -------------------------------------------------------------
    out_bytes = jnp.dtype(out_dtype).itemsize
    if tm is None:
        tm = _pick_tm(m_rows, d_eff * out_bytes)
    else:
        tm = max(1, min(int(tm), m_rows))
        if tm < m_rows:
            tm = min(_round_up(tm, 8), m_rows)
    grid = (pl.cdiv(m_rows, tm),)

    kernel = _make_kernel(packed, mxu_bf16, approx_gelu)

    def run(single_buffer_weights):
        # Grid-invariant operands: constant index_map, optionally single-buffered.
        wkw = {"pipeline_mode": pl.Buffered(1)} if single_buffer_weights else {}
        full = lambda a: pl.BlockSpec(a.shape, lambda i: (0, 0), **wkw)
        return pl.pallas_call(
            kernel,
            out_shape=jax.ShapeDtypeStruct((m_rows, d_eff), out_dtype),
            grid_spec=pltpu.PrefetchScalarGridSpec(
                num_scalar_prefetch=0,
                grid=grid,
                in_specs=[pl.BlockSpec((tm, x_w), lambda i: (i, 0))]
                + [full(a) for a in weight_ops],
                out_specs=pl.BlockSpec((tm, d_eff), lambda i: (i, 0)),
            ),
            compiler_params=pltpu.CompilerParams(
                # Row tiles are independent -> shard across TensorCores (v7x).
                dimension_semantics=("parallel",),
                # v5e's default scoped VMEM is 16 MiB; raise it so ~2 MiB output
                # blocks + f32 intermediates fit on every generation.
                vmem_limit_bytes=48 * 1024 * 1024,
            ),
        )(x_rows, *weight_ops)

    try:
        out = run(True)       # single-buffer the grid-invariant weights
    except Exception:         # pl.Buffered(1) not supported on this build
        out = run(False)

    if packed:
        out = out.reshape(m_pad, D)     # row-major: free re-view of lane groups
        if m_pad != M:
            out = out[:M]
    return out.reshape(B, S, D)


# ----------------------------- reference & test ------------------------------

def _reference(x, params):
    """Pure-JAX mirror of the PyTorch forward (eval mode, float32)."""
    xf = jnp.minimum(x.astype(jnp.float32), MAX_VALUE)[..., None]
    h = jnp.maximum(xf * params["w1"][0] + params["b1"][0], 0.0)
    h = h @ params["w2"] + params["b2"][0]
    mu = jnp.mean(h, -1, keepdims=True)
    var = jnp.mean((h - mu) ** 2, -1, keepdims=True)
    h = (h - mu) / jnp.sqrt(var + LN_EPS) * params["gamma"][0] + params["beta"][0]
    a = _gelu_exact(h @ params["wa1"] + params["ba1"][0])
    a = a @ params["wa2"] + params["ba2"][0]
    return h + a


def init_params(key, d_model=32, mlp_ratio=0.25):
    hidden = int(d_model * mlp_ratio)
    ks = jax.random.split(key, 8)
    u = lambda k, shape, fan_in: jax.random.uniform(
        k, shape, jnp.float32, -1.0 / jnp.sqrt(fan_in), 1.0 / jnp.sqrt(fan_in))
    return {
        # nn.Linear(1, d): weight [d,1] -> stored transposed [1,d]
        "w1": u(ks[0], (1, d_model), 1.0),
        "b1": u(ks[1], (1, d_model), 1.0),
        # nn.Linear(d, d): weight [d,d] -> stored transposed (in x out)
        "w2": u(ks[2], (d_model, d_model), float(d_model)),
        "b2": u(ks[3], (1, d_model), float(d_model)),
        # LayerNorm affine (PyTorch default init: ones / zeros)
        "gamma": jnp.ones((1, d_model), jnp.float32),
        "beta": jnp.zeros((1, d_model), jnp.float32),
        # Adapter fc1 (d -> hidden), fc2 (hidden -> d), stored transposed
        "wa1": u(ks[4], (d_model, hidden), float(d_model)),
        "ba1": u(ks[5], (1, hidden), float(d_model)),
        "wa2": u(ks[6], (hidden, d_model), float(hidden)),
        "ba2": u(ks[7], (1, d_model), float(hidden)),
    }


if __name__ == "__main__":
    key = jax.random.PRNGKey(0)
    k_par, k1, k2, k3 = jax.random.split(key, 4)

    D = 32
    params = init_params(k_par, d_model=D)

    def check(out, ref, atol, rtol, tag):
        assert out.shape == ref.shape, (tag, out.shape, ref.shape)
        out32 = out.astype(jnp.float32)
        err = float(jnp.max(jnp.abs(out32 - ref)))
        assert jnp.allclose(out32, ref, atol=atol, rtol=rtol), (tag, err)

    # 1) exact-precision path, unpacked layout, evenly-tiling rows
    x1 = jax.random.uniform(k1, (2, 8), jnp.float32, 0.0, 600.0)   # exercises clamp
    o1 = jax.block_until_ready(continuous_value_encoder(
        x1, params, out_dtype=jnp.float32, mxu_bf16=False, pack_lanes=False))
    check(o1, _reference(x1, params), 1e-4, 1e-4, "unpacked/f32")

    # 2) exact-precision path, unpacked layout, ragged rows (masked tail block)
    x2 = jax.random.uniform(k2, (3, 37), jnp.float32, 0.0, 600.0)  # M = 111
    o2 = jax.block_until_ready(continuous_value_encoder(
        x2, params, out_dtype=jnp.float32, mxu_bf16=False, pack_lanes=False))
    check(o2, _reference(x2, params), 1e-4, 1e-4, "unpacked/f32/ragged")

    # 3) lane-packed layout (P = 128 // 32 = 4 tokens per row), f32 matmuls
    o3 = jax.block_until_ready(continuous_value_encoder(
        x2, params, out_dtype=jnp.float32, mxu_bf16=False))
    check(o3, _reference(x2, params), 1e-3, 1e-3, "packed/f32")

    # 4) default fast path: lane-packed, bf16 MXU inputs, bf16 output, tanh GELU
    x3 = jax.random.uniform(k3, (4, 256), jnp.float32, 0.0, 600.0)
    o4 = jax.block_until_ready(
        continuous_value_encoder(x3, params, approx_gelu=True))
    assert o4.dtype == jnp.bfloat16, o4.dtype
    check(o4, _reference(x3, params), 1e-1, 2e-2, "packed/bf16 fast path")

    print("KERNEL_OK")
</pallas_src>

<mosaic_0001>
module attributes {stable_mosaic.version = 11 : i64} {
  func.func @kernel(%arg0: i32, %arg1: memref<8x1xf32, #tpu.memory_space<vmem>>, %arg2: memref<1x32xf32, #tpu.memory_space<vmem>>, %arg3: memref<1x32xf32, #tpu.memory_space<vmem>>, %arg4: memref<32x32xf32, #tpu.memory_space<vmem>>, %arg5: memref<1x32xf32, #tpu.memory_space<vmem>>, %arg6: memref<1x32xf32, #tpu.memory_space<vmem>>, %arg7: memref<1x32xf32, #tpu.memory_space<vmem>>, %arg8: memref<32x8xf32, #tpu.memory_space<vmem>>, %arg9: memref<1x8xf32, #tpu.memory_space<vmem>>, %arg10: memref<8x32xf32, #tpu.memory_space<vmem>>, %arg11: memref<1x32xf32, #tpu.memory_space<vmem>>, %arg12: memref<8x32xf32, #tpu.memory_space<vmem>>) attributes {dimension_semantics = [#tpu.dimension_semantics<parallel>], iteration_bounds = array<i64: 2>, scalar_prefetch = 0 : i64, scratch_operands = 0 : i64, tpu.core_type = #tpu.core_type<tc>, window_params = [{transform_indices = @transform_0, window_bounds = array<i64: 8, 1>}, {pipeline_mode = #tpu.pipeline_mode<synchronous>, transform_indices = @transform_1, window_bounds = array<i64: 1, 32>}, {pipeline_mode = #tpu.pipeline_mode<synchronous>, transform_indices = @transform_2, window_bounds = array<i64: 1, 32>}, {pipeline_mode = #tpu.pipeline_mode<synchronous>, transform_indices = @transform_3, window_bounds = array<i64: 32, 32>}, {pipeline_mode = #tpu.pipeline_mode<synchronous>, transform_indices = @transform_4, window_bounds = array<i64: 1, 32>}, {pipeline_mode = #tpu.pipeline_mode<synchronous>, transform_indices = @transform_5, window_bounds = array<i64: 1, 32>}, {pipeline_mode = #tpu.pipeline_mode<synchronous>, transform_indices = @transform_6, window_bounds = array<i64: 1, 32>}, {pipeline_mode = #tpu.pipeline_mode<synchronous>, transform_indices = @transform_7, window_bounds = array<i64: 32, 8>}, {pipeline_mode = #tpu.pipeline_mode<synchronous>, transform_indices = @transform_8, window_bounds = array<i64: 1, 8>}, {pipeline_mode = #tpu.pipeline_mode<synchronous>, transform_indices = @transform_9, window_bounds = array<i64: 8, 32>}, {pipeline_mode = #tpu.pipeline_mode<synchronous>, transform_indices = @transform_10, window_bounds = array<i64: 1, 32>}, {transform_indices = @transform_11, window_bounds = array<i64: 8, 32>}]} {
    %c0 = arith.constant 0 : index
    %c0_0 = arith.constant 0 : index
    %0 = vector.load %arg1[%c0, %c0_0] : memref<8x1xf32, #tpu.memory_space<vmem>>, vector<8x1xf32>
    %cst = arith.constant 5.120000e+02 : f32
    %1 = vector.broadcast %cst : f32 to vector<8x1xf32>
    %2 = arith.minimumf %0, %1 : vector<8x1xf32>
    %c0_1 = arith.constant 0 : index
    %c0_2 = arith.constant 0 : index
    %3 = vector.load %arg2[%c0_1, %c0_2] : memref<1x32xf32, #tpu.memory_space<vmem>>, vector<1x32xf32>
    %4 = vector.broadcast %2 : vector<8x1xf32> to vector<8x32xf32>
    %5 = vector.broadcast %3 : vector<1x32xf32> to vector<8x32xf32>
    %6 = arith.mulf %4, %5 : vector<8x32xf32>
    %c0_3 = arith.constant 0 : index
    %c0_4 = arith.constant 0 : index
    %7 = vector.load %arg3[%c0_3, %c0_4] : memref<1x32xf32, #tpu.memory_space<vmem>>, vector<1x32xf32>
    %8 = vector.broadcast %7 : vector<1x32xf32> to vector<8x32xf32>
    %9 = arith.addf %6, %8 : vector<8x32xf32>
    %cst_5 = arith.constant 0.000000e+00 : f32
    %10 = vector.broadcast %cst_5 : f32 to vector<8x32xf32>
    %11 = arith.maximumf %9, %10 : vector<8x32xf32>
    %c0_6 = arith.constant 0 : index
    %c0_7 = arith.constant 0 : index
    %12 = vector.load %arg4[%c0_6, %c0_7] : memref<32x32xf32, #tpu.memory_space<vmem>>, vector<32x32xf32>
    %cst_8 = arith.constant dense<0.000000e+00> : vector<8x32xf32>
    %13 = tpu.matmul %11, %12, %cst_8 {dimension_numbers = #tpu.dot_dimension_numbers<[1], [0], [0], [1], [0, 0, 1, 1], [], []>} : vector<8x32xf32>, vector<32x32xf32>, vector<8x32xf32> -> vector<8x32xf32>
    %c0_9 = arith.constant 0 : index
    %c0_10 = arith.constant 0 : index
    %14 = vector.load %arg5[%c0_9, %c0_10] : memref<1x32xf32, #tpu.memory_space<vmem>>, vector<1x32xf32>
    %15 = vector.broadcast %14 : vector<1x32xf32> to vector<8x32xf32>
    %16 = arith.addf %13, %15 : vector<8x32xf32>
    %cst_11 = arith.constant dense<0.000000e+00> : vector<8xf32>
    %17 = vector.multi_reduction <add>, %16, %cst_11 [1] : vector<8x32xf32> to vector<8xf32>
    %18 = vector.shape_cast %17 : vector<8xf32> to vector<8x1xf32>
    %cst_12 = arith.constant 3.200000e+01 : f32
    %19 = vector.broadcast %cst_12 : f32 to vector<8x1xf32>
    %20 = arith.divf %18, %19 : vector<8x1xf32>
    %21 = vector.broadcast %20 : vector<8x1xf32> to vector<8x32xf32>
    %22 = arith.subf %16, %21 : vector<8x32xf32>
    %23 = arith.mulf %22, %22 : vector<8x32xf32>
    %cst_13 = arith.constant dense<0.000000e+00> : vector<8xf32>
    %24 = vector.multi_reduction <add>, %23, %cst_13 [1] : vector<8x32xf32> to vector<8xf32>
    %25 = vector.shape_cast %24 : vector<8xf32> to vector<8x1xf32>
    %cst_14 = arith.constant 3.200000e+01 : f32
    %26 = vector.broadcast %cst_14 : f32 to vector<8x1xf32>
    %27 = arith.divf %25, %26 : vector<8x1xf32>
    %cst_15 = arith.constant 9.99999974E-6 : f32
    %28 = vector.broadcast %cst_15 : f32 to vector<8x1xf32>
    %29 = arith.addf %27, %28 : vector<8x1xf32>
    %30 = math.rsqrt %29 : vector<8x1xf32>
    %31 = vector.broadcast %30 : vector<8x1xf32> to vector<8x32xf32>
    %32 = arith.mulf %22, %31 : vector<8x32xf32>
    %c0_16 = arith.constant 0 : index
    %c0_17 = arith.constant 0 : index
    %33 = vector.load %arg6[%c0_16, %c0_17] : memref<1x32xf32, #tpu.memory_space<vmem>>, vector<1x32xf32>
    %34 = vector.broadcast %33 : vector<1x32xf32> to vector<8x32xf32>
    %35 = arith.mulf %32, %34 : vector<8x32xf32>
    %c0_18 = arith.constant 0 : index
    %c0_19 = arith.constant 0 : index
    %36 = vector.load %arg7[%c0_18, %c0_19] : memref<1x32xf32, #tpu.memory_space<vmem>>, vector<1x32xf32>
    %37 = vector.broadcast %36 : vector<1x32xf32> to vector<8x32xf32>
    %38 = arith.addf %35, %37 : vector<8x32xf32>
    %c0_20 = arith.constant 0 : index
    %c0_21 = arith.constant 0 : index
    %39 = vector.load %arg8[%c0_20, %c0_21] : memref<32x8xf32, #tpu.memory_space<vmem>>, vector<32x8xf32>
    %cst_22 = arith.constant dense<0.000000e+00> : vector<8x8xf32>
    %40 = tpu.matmul %38, %39, %cst_22 {dimension_numbers = #tpu.dot_dimension_numbers<[1], [0], [0], [1], [0, 0, 1, 1], [], []>} : vector<8x32xf32>, vector<32x8xf32>, vector<8x8xf32> -> vector<8x8xf32>
    %c0_23 = arith.constant 0 : index
    %c0_24 = arith.constant 0 : index
    %41 = vector.load %arg9[%c0_23, %c0_24] : memref<1x8xf32, #tpu.memory_space<vmem>>, vector<1x8xf32>
    %42 = vector.broadcast %41 : vector<1x8xf32> to vector<8x8xf32>
    %43 = arith.addf %40, %42 : vector<8x8xf32>
    %cst_25 = arith.constant 5.000000e-01 : f32
    %44 = vector.broadcast %cst_25 : f32 to vector<8x8xf32>
    %45 = arith.mulf %44, %43 : vector<8x8xf32>
    %cst_26 = arith.constant 0.707106769 : f32
    %46 = vector.broadcast %cst_26 : f32 to vector<8x8xf32>
    %47 = arith.mulf %43, %46 : vector<8x8xf32>
    %48 = math.erf %47 : vector<8x8xf32>
    %cst_27 = arith.constant 1.000000e+00 : f32
    %49 = vector.broadcast %cst_27 : f32 to vector<8x8xf32>
    %50 = arith.addf %49, %48 : vector<8x8xf32>
    %51 = arith.mulf %45, %50 : vector<8x8xf32>
    %c0_28 = arith.constant 0 : index
    %c0_29 = arith.constant 0 : index
    %52 = vector.load %arg10[%c0_28, %c0_29] : memref<8x32xf32, #tpu.memory_space<vmem>>, vector<8x32xf32>
    %cst_30 = arith.constant dense<0.000000e+00> : vector<8x32xf32>
    %53 = tpu.matmul %51, %52, %cst_30 {dimension_numbers = #tpu.dot_dimension_numbers<[1], [0], [0], [1], [0, 0, 1, 1], [], []>} : vector<8x8xf32>, vector<8x32xf32>, vector<8x32xf32> -> vector<8x32xf32>
    %c0_31 = arith.constant 0 : index
    %c0_32 = arith.constant 0 : index
    %54 = vector.load %arg11[%c0_31, %c0_32] : memref<1x32xf32, #tpu.memory_space<vmem>>, vector<1x32xf32>
    %55 = vector.broadcast %54 : vector<1x32xf32> to vector<8x32xf32>
    %56 = arith.addf %53, %55 : vector<8x32xf32>
    %57 = arith.addf %38, %56 : vector<8x32xf32>
    %c0_33 = arith.constant 0 : index
    %c0_34 = arith.constant 0 : index
    %58 = vector.load %arg12[%c0_33, %c0_34] : memref<8x32xf32, #tpu.memory_space<vmem>>, vector<8x32xf32>
    tpu.vector_store %arg12[%c0_33, %c0_34], %57 {strides = array<i32>} : memref<8x32xf32, #tpu.memory_space<vmem>>, vector<8x32xf32>,
    return
  }
  func.func @transform_0(%arg0: i32) -> (i32, i32) {
    %c0_i32 = arith.constant 0 : i32
    %c0_i32_0 = arith.constant 0 : i32
    return %arg0, %c0_i32 : i32, i32
  }
  func.func @transform_1(%arg0: i32) -> (i32, i32) {
    %c0_i32 = arith.constant 0 : i32
    %c0_i32_0 = arith.constant 0 : i32
    %c0_i32_1 = arith.constant 0 : i32
    return %c0_i32, %c0_i32_0 : i32, i32
  }
  func.func @transform_2(%arg0: i32) -> (i32, i32) {
    %c0_i32 = arith.constant 0 : i32
    %c0_i32_0 = arith.constant 0 : i32
    %c0_i32_1 = arith.constant 0 : i32
    return %c0_i32, %c0_i32_0 : i32, i32
  }
  func.func @transform_3(%arg0: i32) -> (i32, i32) {
    %c0_i32 = arith.constant 0 : i32
    %c0_i32_0 = arith.constant 0 : i32
    %c0_i32_1 = arith.constant 0 : i32
    return %c0_i32, %c0_i32_0 : i32, i32
  }
  func.func @transform_4(%arg0: i32) -> (i32, i32) {
    %c0_i32 = arith.constant 0 : i32
    %c0_i32_0 = arith.constant 0 : i32
    %c0_i32_1 = arith.constant 0 : i32
    return %c0_i32, %c0_i32_0 : i32, i32
  }
  func.func @transform_5(%arg0: i32) -> (i32, i32) {
    %c0_i32 = arith.constant 0 : i32
    %c0_i32_0 = arith.constant 0 : i32
    %c0_i32_1 = arith.constant 0 : i32
    return %c0_i32, %c0_i32_0 : i32, i32
  }
  func.func @transform_6(%arg0: i32) -> (i32, i32) {
    %c0_i32 = arith.constant 0 : i32
    %c0_i32_0 = arith.constant 0 : i32
    %c0_i32_1 = arith.constant 0 : i32
    return %c0_i32, %c0_i32_0 : i32, i32
  }
  func.func @transform_7(%arg0: i32) -> (i32, i32) {
    %c0_i32 = arith.constant 0 : i32
    %c0_i32_0 = arith.constant 0 : i32
    %c0_i32_1 = arith.constant 0 : i32
    return %c0_i32, %c0_i32_0 : i32, i32
  }
  func.func @transform_8(%arg0: i32) -> (i32, i32) {
    %c0_i32 = arith.constant 0 : i32
    %c0_i32_0 = arith.constant 0 : i32
    %c0_i32_1 = arith.constant 0 : i32
    return %c0_i32, %c0_i32_0 : i32, i32
  }
  func.func @transform_9(%arg0: i32) -> (i32, i32) {
    %c0_i32 = arith.constant 0 : i32
    %c0_i32_0 = arith.constant 0 : i32
    %c0_i32_1 = arith.constant 0 : i32
    return %c0_i32, %c0_i32_0 : i32, i32
  }
  func.func @transform_10(%arg0: i32) -> (i32, i32) {
    %c0_i32 = arith.constant 0 : i32
    %c0_i32_0 = arith.constant 0 : i32
    %c0_i32_1 = arith.constant 0 : i32
    return %c0_i32, %c0_i32_0 : i32, i32
  }
  func.func @transform_11(%arg0: i32) -> (i32, i32) {
    %c0_i32 = arith.constant 0 : i32
    %c0_i32_0 = arith.constant 0 : i32
    return %arg0, %c0_i32 : i32, i32
  }
}

module attributes {stable_mosaic.version = 11 : i64} {
  func.func @kernel(%arg0: i32, %arg1: memref<8x1xf32, #tpu.memory_space<vmem>>, %arg2: memref<1x32xf32, #tpu.memory_space<vmem>>, %arg3: memref<1x32xf32, #tpu.memory_space<vmem>>, %arg4: memref<32x32xf32, #tpu.memory_space<vmem>>, %arg5: memref<1x32xf32, #tpu.memory_space<vmem>>, %arg6: memref<1x32xf32, #tpu.memory_space<vmem>>, %arg7: memref<1x32xf32, #tpu.memory_space<vmem>>, %arg8: memref<32x8xf32, #tpu.memory_space<vmem>>, %arg9: memref<1x8xf32, #tpu.memory_space<vmem>>, %arg10: memref<8x32xf32, #tpu.memory_space<vmem>>, %arg11: memref<1x32xf32, #tpu.memory_space<vmem>>, %arg12: memref<8x32xf32, #tpu.memory_space<vmem>>) attributes {dimension_semantics = [#tpu.dimension_semantics<parallel>], iteration_bounds = array<i64: 2>, scalar_prefetch = 0 : i64, scratch_operands = 0 : i64, tpu.core_type = #tpu.core_type<tc>, window_params = [{transform_indices = @transform_0, window_bounds = array<i64: 8, 1>}, {pipeline_mode = #tpu.pipeline_mode<synchronous>, transform_indices = @transform_1, window_bounds = array<i64: 1, 32>}, {pipeline_mode = #tpu.pipeline_mode<synchronous>, transform_indices = @transform_2, window_bounds = array<i64: 1, 32>}, {pipeline_mode = #tpu.pipeline_mode<synchronous>, transform_indices = @transform_3, window_bounds = array<i64: 32, 32>}, {pipeline_mode = #tpu.pipeline_mode<synchronous>, transform_indices = @transform_4, window_bounds = array<i64: 1, 32>}, {pipeline_mode = #tpu.pipeline_mode<synchronous>, transform_indices = @transform_5, window_bounds = array<i64: 1, 32>}, {pipeline_mode = #tpu.pipeline_mode<synchronous>, transform_indices = @transform_6, window_bounds = array<i64: 1, 32>}, {pipeline_mode = #tpu.pipeline_mode<synchronous>, transform_indices = @transform_7, window_bounds = array<i64: 32, 8>}, {pipeline_mode = #tpu.pipeline_mode<synchronous>, transform_indices = @transform_8, window_bounds = array<i64: 1, 8>}, {pipeline_mode = #tpu.pipeline_mode<synchronous>, transform_indices = @transform_9, window_bounds = array<i64: 8, 32>}, {pipeline_mode = #tpu.pipeline_mode<synchronous>, transform_indices = @transform_10, window_bounds = array<i64: 1, 32>}, {transform_indices = @transform_11, window_bounds = array<i64: 8, 32>}]} {
    %c0 = arith.constant 0 : index
    %c0_0 = arith.constant 0 : index
    %0 = vector.load %arg1[%c0, %c0_0] : memref<8x1xf32, #tpu.memory_space<vmem>>, vector<8x1xf32>
    %cst = arith.constant 5.120000e+02 : f32
    %1 = vector.broadcast %cst : f32 to vector<8x1xf32>
    %2 = arith.minimumf %0, %1 : vector<8x1xf32>
    %c0_1 = arith.constant 0 : index
    %c0_2 = arith.constant 0 : index
    %3 = vector.load %arg2[%c0_1, %c0_2] : memref<1x32xf32, #tpu.memory_space<vmem>>, vector<1x32xf32>
    %4 = vector.broadcast %2 : vector<8x1xf32> to vector<8x32xf32>
    %5 = vector.broadcast %3 : vector<1x32xf32> to vector<8x32xf32>
    %6 = arith.mulf %4, %5 : vector<8x32xf32>
    %c0_3 = arith.constant 0 : index
    %c0_4 = arith.constant 0 : index
    %7 = vector.load %arg3[%c0_3, %c0_4] : memref<1x32xf32, #tpu.memory_space<vmem>>, vector<1x32xf32>
    %8 = vector.broadcast %7 : vector<1x32xf32> to vector<8x32xf32>
    %9 = arith.addf %6, %8 : vector<8x32xf32>
    %cst_5 = arith.constant 0.000000e+00 : f32
    %10 = vector.broadcast %cst_5 : f32 to vector<8x32xf32>
    %11 = arith.maximumf %9, %10 : vector<8x32xf32>
    %c0_6 = arith.constant 0 : index
    %c0_7 = arith.constant 0 : index
    %12 = vector.load %arg4[%c0_6, %c0_7] : memref<32x32xf32, #tpu.memory_space<vmem>>, vector<32x32xf32>
    %cst_8 = arith.constant dense<0.000000e+00> : vector<8x32xf32>
    %13 = tpu.matmul %11, %12, %cst_8 {dimension_numbers = #tpu.dot_dimension_numbers<[1], [0], [0], [1], [0, 0, 1, 1], [], []>} : vector<8x32xf32>, vector<32x32xf32>, vector<8x32xf32> -> vector<8x32xf32>
    %c0_9 = arith.constant 0 : index
    %c0_10 = arith.constant 0 : index
    %14 = vector.load %arg5[%c0_9, %c0_10] : memref<1x32xf32, #tpu.memory_space<vmem>>, vector<1x32xf32>
    %15 = vector.broadcast %14 : vector<1x32xf32> to vector<8x32xf32>
    %16 = arith.addf %13, %15 : vector<8x32xf32>
    %cst_11 = arith.constant dense<0.000000e+00> : vector<8xf32>
    %17 = vector.multi_reduction <add>, %16, %cst_11 [1] : vector<8x32xf32> to vector<8xf32>
    %18 = vector.shape_cast %17 : vector<8xf32> to vector<8x1xf32>
    %cst_12 = arith.constant 3.200000e+01 : f32
    %19 = vector.broadcast %cst_12 : f32 to vector<8x1xf32>
    %20 = arith.divf %18, %19 : vector<8x1xf32>
    %21 = vector.broadcast %20 : vector<8x1xf32> to vector<8x32xf32>
    %22 = arith.subf %16, %21 : vector<8x32xf32>
    %23 = arith.mulf %22, %22 : vector<8x32xf32>
    %cst_13 = arith.constant dense<0.000000e+00> : vector<8xf32>
    %24 = vector.multi_reduction <add>, %23, %cst_13 [1] : vector<8x32xf32> to vector<8xf32>
    %25 = vector.shape_cast %24 : vector<8xf32> to vector<8x1xf32>
    %cst_14 = arith.constant 3.200000e+01 : f32
    %26 = vector.broadcast %cst_14 : f32 to vector<8x1xf32>
    %27 = arith.divf %25, %26 : vector<8x1xf32>
    %cst_15 = arith.constant 9.99999974E-6 : f32
    %28 = vector.broadcast %cst_15 : f32 to vector<8x1xf32>
    %29 = arith.addf %27, %28 : vector<8x1xf32>
    %30 = math.rsqrt %29 : vector<8x1xf32>
    %31 = vector.broadcast %30 : vector<8x1xf32> to vector<8x32xf32>
    %32 = arith.mulf %22, %31 : vector<8x32xf32>
    %c0_16 = arith.constant 0 : index
    %c0_17 = arith.constant 0 : index
    %33 = vector.load %arg6[%c0_16, %c0_17] : memref<1x32xf32, #tpu.memory_space<vmem>>, vector<1x32xf32>
    %34 = vector.broadcast %33 : vector<1x32xf32> to vector<8x32xf32>
    %35 = arith.mulf %32, %34 : vector<8x32xf32>
    %c0_18 = arith.constant 0 : index
    %c0_19 = arith.constant 0 : index
    %36 = vector.load %arg7[%c0_18, %c0_19] : memref<1x32xf32, #tpu.memory_space<vmem>>, vector<1x32xf32>
    %37 = vector.broadcast %36 : vector<1x32xf32> to vector<8x32xf32>
    %38 = arith.addf %35, %37 : vector<8x32xf32>
    %c0_20 = arith.constant 0 : index
    %c0_21 = arith.constant 0 : index
    %39 = vector.load %arg8[%c0_20, %c0_21] : memref<32x8xf32, #tpu.memory_space<vmem>>, vector<32x8xf32>
    %cst_22 = arith.constant dense<0.000000e+00> : vector<8x8xf32>
    %40 = tpu.matmul %38, %39, %cst_22 {dimension_numbers = #tpu.dot_dimension_numbers<[1], [0], [0], [1], [0, 0, 1, 1], [], []>} : vector<8x32xf32>, vector<32x8xf32>, vector<8x8xf32> -> vector<8x8xf32>
    %c0_23 = arith.constant 0 : index
    %c0_24 = arith.constant 0 : index
    %41 = vector.load %arg9[%c0_23, %c0_24] : memref<1x8xf32, #tpu.memory_space<vmem>>, vector<1x8xf32>
    %42 = vector.broadcast %41 : vector<1x8xf32> to vector<8x8xf32>
    %43 = arith.addf %40, %42 : vector<8x8xf32>
    %cst_25 = arith.constant 5.000000e-01 : f32
    %44 = vector.broadcast %cst_25 : f32 to vector<8x8xf32>
    %45 = arith.mulf %44, %43 : vector<8x8xf32>
    %cst_26 = arith.constant 0.707106769 : f32
    %46 = vector.broadcast %cst_26 : f32 to vector<8x8xf32>
    %47 = arith.mulf %43, %46 : vector<8x8xf32>
    %48 = math.erf %47 : vector<8x8xf32>
    %cst_27 = arith.constant 1.000000e+00 : f32
    %49 = vector.broadcast %cst_27 : f32 to vector<8x8xf32>
    %50 = arith.addf %49, %48 : vector<8x8xf32>
    %51 = arith.mulf %45, %50 : vector<8x8xf32>
    %c0_28 = arith.constant 0 : index
    %c0_29 = arith.constant 0 : index
    %52 = vector.load %arg10[%c0_28, %c0_29] : memref<8x32xf32, #tpu.memory_space<vmem>>, vector<8x32xf32>
    %cst_30 = arith.constant dense<0.000000e+00> : vector<8x32xf32>
    %53 = tpu.matmul %51, %52, %cst_30 {dimension_numbers = #tpu.dot_dimension_numbers<[1], [0], [0], [1], [0, 0, 1, 1], [], []>} : vector<8x8xf32>, vector<8x32xf32>, vector<8x32xf32> -> vector<8x32xf32>
    %c0_31 = arith.constant 0 : index
    %c0_32 = arith.constant 0 : index
    %54 = vector.load %arg11[%c0_31, %c0_32] : memref<1x32xf32, #tpu.memory_space<vmem>>, vector<1x32xf32>
    %55 = vector.broadcast %54 : vector<1x32xf32> to vector<8x32xf32>
    %56 = arith.addf %53, %55 : vector<8x32xf32>
    %57 = arith.addf %38, %56 : vector<8x32xf32>
    %c0_33 = arith.constant 0 : index
    %c0_34 = arith.constant 0 : index
    %58 = vector.load %arg12[%c0_33, %c0_34] : memref<8x32xf32, #tpu.memory_space<vmem>>, vector<8x32xf32>
    tpu.vector_store %arg12[%c0_33, %c0_34], %57 {strides = array<i32>} : memref<8x32xf32, #tpu.memory_space<vmem>>, vector<8x32xf32>,
    return
  }
  func.func @transform_0(%arg0: i32) -> (i32, i32) {
    %c0_i32 = arith.constant 0 : i32
    %c0_i32_0 = arith.constant 0 : i32
    return %arg0, %c0_i32 : i32, i32
  }
  func.func @transform_1(%arg0: i32) -> (i32, i32) {
    %c0_i32 = arith.constant 0 : i32
    %c0_i32_0 = arith.constant 0 : i32
    %c0_i32_1 = arith.constant 0 : i32
    return %c0_i32, %c0_i32_0 : i32, i32
  }
  func.func @transform_2(%arg0: i32) -> (i32, i32) {
    %c0_i32 = arith.constant 0 : i32
    %c0_i32_0 = arith.constant 0 : i32
    %c0_i32_1 = arith.constant 0 : i32
    return %c0_i32, %c0_i32_0 : i32, i32
  }
  func.func @transform_3(%arg0: i32) -> (i32, i32) {
    %c0_i32 = arith.constant 0 : i32
    %c0_i32_0 = arith.constant 0 : i32
    %c0_i32_1 = arith.constant 0 : i32
    return %c0_i32, %c0_i32_0 : i32, i32
  }
  func.func @transform_4(%arg0: i32) -> (i32, i32) {
    %c0_i32 = arith.constant 0 : i32
    %c0_i32_0 = arith.constant 0 : i32
    %c0_i32_1 = arith.constant 0 : i32
    return %c0_i32, %c0_i32_0 : i32, i32
  }
  func.func @transform_5(%arg0: i32) -> (i32, i32) {
    %c0_i32 = arith.constant 0 : i32
    %c0_i32_0 = arith.constant 0 : i32
    %c0_i32_1 = arith.constant 0 : i32
    return %c0_i32, %c0_i32_0 : i32, i32
  }
  func.func @transform_6(%arg0: i32) -> (i32, i32) {
    %c0_i32 = arith.constant 0 : i32
    %c0_i32_0 = arith.constant 0 : i32
    %c0_i32_1 = arith.constant 0 : i32
    return %c0_i32, %c0_i32_0 : i32, i32
  }
  func.func @transform_7(%arg0: i32) -> (i32, i32) {
    %c0_i32 = arith.constant 0 : i32
    %c0_i32_0 = arith.constant 0 : i32
    %c0_i32_1 = arith.constant 0 : i32
    return %c0_i32, %c0_i32_0 : i32, i32
  }
  func.func @transform_8(%arg0: i32) -> (i32, i32) {
    %c0_i32 = arith.constant 0 : i32
    %c0_i32_0 = arith.constant 0 : i32
    %c0_i32_1 = arith.constant 0 : i32
    return %c0_i32, %c0_i32_0 : i32, i32
  }
  func.func @transform_9(%arg0: i32) -> (i32, i32) {
    %c0_i32 = arith.constant 0 : i32
    %c0_i32_0 = arith.constant 0 : i32
    %c0_i32_1 = arith.constant 0 : i32
    return %c0_i32, %c0_i32_0 : i32, i32
  }
  func.func @transform_10(%arg0: i32) -> (i32, i32) {
    %c0_i32 = arith.constant 0 : i32
    %c0_i32_0 = arith.constant 0 : i32
    %c0_i32_1 = arith.constant 0 : i32
    return %c0_i32, %c0_i32_0 : i32, i32
  }
  func.func @transform_11(%arg0: i32) -> (i32, i32) {
    %c0_i32 = arith.constant 0 : i32
    %c0_i32_0 = arith.constant 0 : i32
    return %arg0, %c0_i32 : i32, i32
  }
}

</mosaic_0001>

<llo_original>
// kernel: tpu_custom_call.1
$region0: #{tpu_custom_call.1}
  #allocation0 [shape = 'u32[]', space=smem, size = 0x4, offset = 0x4, fixed_abs, tag = 'smem constant byte address 0x4 - core index']
  #allocation1 [shape = 'u32[144,128]{1,0:T(1,128)}', space=vmem, size = 0x12000, scoped, tag = 'internal scratch']
  %s0 = inlined_call_operand.vmem [shape: f32[16,1], index: 0, kind: input, shape index: {}]
  %s1 = inlined_call_operand.vmem [shape: f32[1,32], index: 1, kind: input, shape index: {}]
  %s2 = inlined_call_operand.vmem [shape: f32[1,32], index: 2, kind: input, shape index: {}]
  %s3 = inlined_call_operand.vmem [shape: f32[32,32], index: 3, kind: input, shape index: {}]
  %s4 = inlined_call_operand.vmem [shape: f32[1,32], index: 4, kind: input, shape index: {}]
  %s5 = inlined_call_operand.vmem [shape: f32[1,32], index: 5, kind: input, shape index: {}]
  %s6 = inlined_call_operand.vmem [shape: f32[1,32], index: 6, kind: input, shape index: {}]
  %s7 = inlined_call_operand.vmem [shape: f32[32,8], index: 7, kind: input, shape index: {}]
  %s8 = inlined_call_operand.vmem [shape: f32[1,8], index: 8, kind: input, shape index: {}]
  %s9 = inlined_call_operand.vmem [shape: f32[8,32], index: 9, kind: input, shape index: {}]
  %s10 = inlined_call_operand.vmem [shape: f32[1,32], index: 10, kind: input, shape index: {}]
  %s11 = inlined_call_operand.hbm [shape: f32[16,32], index: 11, kind: output, shape index: {}]
  %s12 = sld [smem:[#allocation0]]
  $region77: #{tpu_custom_call.1} parent=0
    _
  %s14 = ssub.s32 1, %s12
  %s15 = scalar_select 0, %s14, %s12
  $region1: #{tpu_custom_call.1} parent=0
    #allocation2 [shape = 'u8[8192]{0}', space=vmem, size = 0x2000, scoped, tag = 'output window, operand 0']
    #allocation3 [shape = 's32[2]{0}', space=sflag, size = 0x8, scoped, tag = 'scoped memory for tpu_custom_call.1']
    %16 = vsyncpa [#allocation3], 0
    %s17 = scalar_lea.sflag [#allocation3], 1
    %18 = vsyncpa %s17, 0
    loop: start=0, step=1, limit=4
    $region2: #{tpu_custom_call.1} parent=1 // loop_pre_header
      _
    $region3: #{tpu_custom_call.1} parent=1 // loop_header
      %s20 = sphi 0, %s24
      %p21 = scmp.ge.s32.totalorder %s20, 4
      %s30 = sphi 0, %s32
      %s33 = sphi 0, %s30
      %s34 = sphi 0, %s33
      %s50 = sphi 0, %s34
      %s54 = sphi 0, %s54
      %s56 = sphi 0, %s54
      %s57 = sphi 0, %s56
      %s71 = sphi 0, %s57
      %s75 = sphi 0, %s75
      %s77 = sphi 0, %s75
      %s78 = sphi 0, %s77
      %s92 = sphi 0, %s78
      %s96 = sphi 0, %s96
      %s98 = sphi 0, %s96
      %s99 = sphi 0, %s98
      %s113 = sphi 0, %s99
      %s117 = sphi 0, %s117
      %s119 = sphi 0, %s117
      %s120 = sphi 0, %s119
      %s134 = sphi 0, %s120
      %s138 = sphi 0, %s138
      %s140 = sphi 0, %s138
      %s141 = sphi 0, %s140
      %s155 = sphi 0, %s141
      %s159 = sphi 0, %s159
      %s161 = sphi 0, %s159
      %s162 = sphi 0, %s161
      %s176 = sphi 0, %s162
      %s180 = sphi 0, %s180
      %s182 = sphi 0, %s180
      %s183 = sphi 0, %s182
      %s197 = sphi 0, %s183
      %s201 = sphi 0, %s201
      %s203 = sphi 0, %s201
      %s204 = sphi 0, %s203
      %s218 = sphi 0, %s204
      %s222 = sphi 0, %s222
      %s224 = sphi 0, %s222
      %s225 = sphi 0, %s224
      %s239 = sphi 0, %s225
      %s243 = sphi 0, %s243
      %s245 = sphi 0, %s243
      %s246 = sphi 0, %s245
      %s260 = sphi 0, %s246
      %s266 = sphi 0, %s268
      %s269 = sphi 0, %s266
      %s270 = sphi 0, %s269
      %s286 = sphi 0, %s270
    $region4: #{tpu_custom_call.1} parent=1 // loop_header_branch
      %23 = sbr.rel (%p21) target = $region8
    $region5: #{tpu_custom_call.1} parent=1 // loop_body
      %s25 = ssub.s32 %s20, 1
      %s26 = ssub.s32 %s20, 2
      %s27 = sadd.s32 %s20, 1
      %s28 = ssub.s32 %s20, %s27
      %p29 = scmp.eq.s32.totalorder %s28, 0
      %s31 = sadd.s32 %s30, 1
      %s32 = scalar_select %p29, %s30, %s31
      %p35 = pneg %p29
      %p36 = scmp.eq.s32.totalorder %s20, 1
      %p37 = por %p35, %p36
      %p38 = scmp.ne.s32.totalorder %s30, %s33
      %p39 = scmp.eq.s32.totalorder %s20, 0
      %p40 = por %p38, %p39
      %p41 = scmp.ne.s32.totalorder %s30, %s33
      %p42 = scmp.eq.s32.totalorder %s25, 1
      %p43 = por %p41, %p42
      %p44 = scmp.ne.s32.totalorder %s33, %s34
      %p45 = scmp.eq.s32.totalorder %s25, 0
      %p46 = por %p44, %p45
      %p47 = scmp.ne.s32.totalorder %s33, %s34
      %p48 = scmp.eq.s32.totalorder %s26, 1
      %p49 = por %p47, %p48
      %p51 = scmp.ne.s32.totalorder %s34, %s50
      %p52 = scmp.eq.s32.totalorder %s26, 0
      %p53 = por %p51, %p52
      %s55 = sadd.s32 %s54, 1
      %p58 = scmp.eq.s32.totalorder %s20, 1
      %p59 = scmp.ne.s32.totalorder %s54, %s56
      %p60 = scmp.eq.s32.totalorder %s20, 0
      %p61 = por %p59, %p60
      %p62 = scmp.ne.s32.totalorder %s54, %s56
      %p63 = scmp.eq.s32.totalorder %s25, 1
      %p64 = por %p62, %p63
      %p65 = scmp.ne.s32.totalorder %s56, %s57
      %p66 = scmp.eq.s32.totalorder %s25, 0
      %p67 = por %p65, %p66
      %p68 = scmp.ne.s32.totalorder %s56, %s57
      %p69 = scmp.eq.s32.totalorder %s26, 1
      %p70 = por %p68, %p69
      %p72 = scmp.ne.s32.totalorder %s57, %s71
      %p73 = scmp.eq.s32.totalorder %s26, 0
      %p74 = por %p72, %p73
      %s76 = sadd.s32 %s75, 1
      %p79 = scmp.eq.s32.totalorder %s20, 1
      %p80 = scmp.ne.s32.totalorder %s75, %s77
      %p81 = scmp.eq.s32.totalorder %s20, 0
      %p82 = por %p80, %p81
      %p83 = scmp.ne.s32.totalorder %s75, %s77
      %p84 = scmp.eq.s32.totalorder %s25, 1
      %p85 = por %p83, %p84
      %p86 = scmp.ne.s32.totalorder %s77, %s78
      %p87 = scmp.eq.s32.totalorder %s25, 0
      %p88 = por %p86, %p87
      %p89 = scmp.ne.s32.totalorder %s77, %s78
      %p90 = scmp.eq.s32.totalorder %s26, 1
      %p91 = por %p89, %p90
      %p93 = scmp.ne.s32.totalorder %s78, %s92
      %p94 = scmp.eq.s32.totalorder %s26, 0
      %p95 = por %p93, %p94
      %s97 = sadd.s32 %s96, 1
      %p100 = scmp.eq.s32.totalorder %s20, 1
      %p101 = scmp.ne.s32.totalorder %s96, %s98
      %p102 = scmp.eq.s32.totalorder %s20, 0
      %p103 = por %p101, %p102
      %p104 = scmp.ne.s32.totalorder %s96, %s98
      %p105 = scmp.eq.s32.totalorder %s25, 1
      %p106 = por %p104, %p105
      %p107 = scmp.ne.s32.totalorder %s98, %s99
      %p108 = scmp.eq.s32.totalorder %s25, 0
      %p109 = por %p107, %p108
      %p110 = scmp.ne.s32.totalorder %s98, %s99
      %p111 = scmp.eq.s32.totalorder %s26, 1
      %p112 = por %p110, %p111
      %p114 = scmp.ne.s32.totalorder %s99, %s113
      %p115 = scmp.eq.s32.totalorder %s26, 0
      %p116 = por %p114, %p115
      %s118 = sadd.s32 %s117, 1
      %p121 = scmp.eq.s32.totalorder %s20, 1
      %p122 = scmp.ne.s32.totalorder %s117, %s119
      %p123 = scmp.eq.s32.totalorder %s20, 0
      %p124 = por %p122, %p123
      %p125 = scmp.ne.s32.totalorder %s117, %s119
      %p126 = scmp.eq.s32.totalorder %s25, 1
      %p127 = por %p125, %p126
      %p128 = scmp.ne.s32.totalorder %s119, %s120
      %p129 = scmp.eq.s32.totalorder %s25, 0
      %p130 = por %p128, %p129
      %p131 = scmp.ne.s32.totalorder %s119, %s120
      %p132 = scmp.eq.s32.totalorder %s26, 1
      %p133 = por %p131, %p132
      %p135 = scmp.ne.s32.totalorder %s120, %s134
      %p136 = scmp.eq.s32.totalorder %s26, 0
      %p137 = por %p135, %p136
      %s139 = sadd.s32 %s138, 1
      %p142 = scmp.eq.s32.totalorder %s20, 1
      %p143 = scmp.ne.s32.totalorder %s138, %s140
      %p144 = scmp.eq.s32.totalorder %s20, 0
      %p145 = por %p143, %p144
      %p146 = scmp.ne.s32.totalorder %s138, %s140
      %p147 = scmp.eq.s32.totalorder %s25, 1
      %p148 = por %p146, %p147
      %p149 = scmp.ne.s32.totalorder %s140, %s141
      %p150 = scmp.eq.s32.totalorder %s25, 0
      %p151 = por %p149, %p150
      %p152 = scmp.ne.s32.totalorder %s140, %s141
      %p153 = scmp.eq.s32.totalorder %s26, 1
      %p154 = por %p152, %p153
      %p156 = scmp.ne.s32.totalorder %s141, %s155
      %p157 = scmp.eq.s32.totalorder %s26, 0
      %p158 = por %p156, %p157
      %s160 = sadd.s32 %s159, 1
      %p163 = scmp.eq.s32.totalorder %s20, 1
      %p164 = scmp.ne.s32.totalorder %s159, %s161
      %p165 = scmp.eq.s32.totalorder %s20, 0
      %p166 = por %p164, %p165
      %p167 = scmp.ne.s32.totalorder %s159, %s161
      %p168 = scmp.eq.s32.totalorder %s25, 1
      %p169 = por %p167, %p168
      %p170 = scmp.ne.s32.totalorder %s161, %s162
      %p171 = scmp.eq.s32.totalorder %s25, 0
      %p172 = por %p170, %p171
      %p173 = scmp.ne.s32.totalorder %s161, %s162
      %p174 = scmp.eq.s32.totalorder %s26, 1
      %p175 = por %p173, %p174
      %p177 = scmp.ne.s32.totalorder %s162, %s176
      %p178 = scmp.eq.s32.totalorder %s26, 0
      %p179 = por %p177, %p178
      %s181 = sadd.s32 %s180, 1
      %p184 = scmp.eq.s32.totalorder %s20, 1
      %p185 = scmp.ne.s32.totalorder %s180, %s182
      %p186 = scmp.eq.s32.totalorder %s20, 0
      %p187 = por %p185, %p186
      %p188 = scmp.ne.s32.totalorder %s180, %s182
      %p189 = scmp.eq.s32.totalorder %s25, 1
      %p190 = por %p188, %p189
      %p191 = scmp.ne.s32.totalorder %s182, %s183
      %p192 = scmp.eq.s32.totalorder %s25, 0
      %p193 = por %p191, %p192
      %p194 = scmp.ne.s32.totalorder %s182, %s183
      %p195 = scmp.eq.s32.totalorder %s26, 1
      %p196 = por %p194, %p195
      %p198 = scmp.ne.s32.totalorder %s183, %s197
      %p199 = scmp.eq.s32.totalorder %s26, 0
      %p200 = por %p198, %p199
      %s202 = sadd.s32 %s201, 1
      %p205 = scmp.eq.s32.totalorder %s20, 1
      %p206 = scmp.ne.s32.totalorder %s201, %s203
      %p207 = scmp.eq.s32.totalorder %s20, 0
      %p208 = por %p206, %p207
      %p209 = scmp.ne.s32.totalorder %s201, %s203
      %p210 = scmp.eq.s32.totalorder %s25, 1
      %p211 = por %p209, %p210
      %p212 = scmp.ne.s32.totalorder %s203, %s204
      %p213 = scmp.eq.s32.totalorder %s25, 0
      %p214 = por %p212, %p213
      %p215 = scmp.ne.s32.totalorder %s203, %s204
      %p216 = scmp.eq.s32.totalorder %s26, 1
      %p217 = por %p215, %p216
      %p219 = scmp.ne.s32.totalorder %s204, %s218
      %p220 = scmp.eq.s32.totalorder %s26, 0
      %p221 = por %p219, %p220
      %s223 = sadd.s32 %s222, 1
      %p226 = scmp.eq.s32.totalorder %s20, 1
      %p227 = scmp.ne.s32.totalorder %s222, %s224
      %p228 = scmp.eq.s32.totalorder %s20, 0
      %p229 = por %p227, %p228
      %p230 = scmp.ne.s32.totalorder %s222, %s224
      %p231 = scmp.eq.s32.totalorder %s25, 1
      %p232 = por %p230, %p231
      %p233 = scmp.ne.s32.totalorder %s224, %s225
      %p234 = scmp.eq.s32.totalorder %s25, 0
      %p235 = por %p233, %p234
      %p236 = scmp.ne.s32.totalorder %s224, %s225
      %p237 = scmp.eq.s32.totalorder %s26, 1
      %p238 = por %p236, %p237
      %p240 = scmp.ne.s32.totalorder %s225, %s239
      %p241 = scmp.eq.s32.totalorder %s26, 0
      %p242 = por %p240, %p241
      %s244 = sadd.s32 %s243, 1
      %p247 = scmp.eq.s32.totalorder %s20, 1
      %p248 = scmp.ne.s32.totalorder %s243, %s245
      %p249 = scmp.eq.s32.totalorder %s20, 0
      %p250 = por %p248, %p249
      %p251 = scmp.ne.s32.totalorder %s243, %s245
      %p252 = scmp.eq.s32.totalorder %s25, 1
      %p253 = por %p251, %p252
      %p254 = scmp.ne.s32.totalorder %s245, %s246
      %p255 = scmp.eq.s32.totalorder %s25, 0
      %p256 = por %p254, %p255
      %p257 = scmp.ne.s32.totalorder %s245, %s246
      %p258 = scmp.eq.s32.totalorder %s26, 1
      %p259 = por %p257, %p258
      %p261 = scmp.ne.s32.totalorder %s246, %s260
      %p262 = scmp.eq.s32.totalorder %s26, 0
      %p263 = por %p261, %p262
      %s264 = ssub.s32 %s20, %s27
      %p265 = scmp.eq.s32.totalorder %s264, 0
      %s267 = sadd.s32 %s266, 1
      %s268 = scalar_select %p265, %s266, %s267
      %p271 = pneg %p265
      %p272 = scmp.eq.s32.totalorder %s20, 1
      %p273 = por %p271, %p272
      %p274 = scmp.ne.s32.totalorder %s266, %s269
      %p275 = scmp.eq.s32.totalorder %s20, 0
      %p276 = por %p274, %p275
      %p277 = scmp.ne.s32.totalorder %s266, %s269
      %p278 = scmp.eq.s32.totalorder %s25, 1
      %p279 = por %p277, %p278
      %p280 = scmp.ne.s32.totalorder %s269, %s270
      %p281 = scmp.eq.s32.totalorder %s25, 0
      %p282 = por %p280, %p281
      %p283 = scmp.ne.s32.totalorder %s269, %s270
      %p284 = scmp.eq.s32.totalorder %s26, 1
      %p285 = por %p283, %p284
      %p287 = scmp.ne.s32.totalorder %s270, %s286
      %p288 = scmp.eq.s32.totalorder %s26, 0
      %p289 = por %p287, %p288
      %p290 = scmp.le.s32.totalorder 1, %s20
      %p291 = scmp.lt.s32.totalorder %s20, 3
      %p292 = pnand %p290, %p291
      %p293 = pneg %p292
      // Predicated region
      $region9: #{tpu_custom_call.1} parent=5 // pred_check
        _
      $region10: #{tpu_custom_call.1} parent=5 // pred_check_branch
        %295 = sbr.rel (%p292) target = $region12
      $region11: #{tpu_custom_call.1} parent=5 // pred_region
        %s296 = ssub.s32 %s20, 1
        // Predicated region
        $region13: #{tpu_custom_call.1} parent=11 // pred_check
          %p297 = pneg %p67
        $region14: #{tpu_custom_call.1} parent=11 // pred_check_branch
          %299 = sbr.rel (%p297) target = $region16
        $region15: #{tpu_custom_call.1} parent=11 // pred_region
          _
        $region16: #{tpu_custom_call.1} parent=11 // pred_fallthru
          _
        // Predicated region
        $region17: #{tpu_custom_call.1} parent=11 // pred_check
          %p300 = pneg %p88
        $region18: #{tpu_custom_call.1} parent=11 // pred_check_branch
          %302 = sbr.rel (%p300) target = $region20
        $region19: #{tpu_custom_call.1} parent=11 // pred_region
          _
        $region20: #{tpu_custom_call.1} parent=11 // pred_fallthru
          _
        // Predicated region
        $region21: #{tpu_custom_call.1} parent=11 // pred_check
          %p303 = pneg %p109
        $region22: #{tpu_custom_call.1} parent=11 // pred_check_branch
          %305 = sbr.rel (%p303) target = $region24
        $region23: #{tpu_custom_call.1} parent=11 // pred_region
          _
        $region24: #{tpu_custom_call.1} parent=11 // pred_fallthru
          _
        // Predicated region
        $region25: #{tpu_custom_call.1} parent=11 // pred_check
          %p306 = pneg %p130
        $region26: #{tpu_custom_call.1} parent=11 // pred_check_branch
          %308 = sbr.rel (%p306) target = $region28
        $region27: #{tpu_custom_call.1} parent=11 // pred_region
          _
        $region28: #{tpu_custom_call.1} parent=11 // pred_fallthru
          _
        // Predicated region
        $region29: #{tpu_custom_call.1} parent=11 // pred_check
          %p309 = pneg %p151
        $region30: #{tpu_custom_call.1} parent=11 // pred_check_branch
          %311 = sbr.rel (%p309) target = $region32
        $region31: #{tpu_custom_call.1} parent=11 // pred_region
          _
        $region32: #{tpu_custom_call.1} parent=11 // pred_fallthru
          _
        // Predicated region
        $region33: #{tpu_custom_call.1} parent=11 // pred_check
          %p312 = pneg %p172
        $region34: #{tpu_custom_call.1} parent=11 // pred_check_branch
          %314 = sbr.rel (%p312) target = $region36
        $region35: #{tpu_custom_call.1} parent=11 // pred_region
          _
        $region36: #{tpu_custom_call.1} parent=11 // pred_fallthru
          _
        // Predicated region
        $region37: #{tpu_custom_call.1} parent=11 // pred_check
          %p315 = pneg %p193
        $region38: #{tpu_custom_call.1} parent=11 // pred_check_branch
          %317 = sbr.rel (%p315) target = $region40
        $region39: #{tpu_custom_call.1} parent=11 // pred_region
          _
        $region40: #{tpu_custom_call.1} parent=11 // pred_fallthru
          _
        // Predicated region
        $region41: #{tpu_custom_call.1} parent=11 // pred_check
          %p318 = pneg %p214
        $region42: #{tpu_custom_call.1} parent=11 // pred_check_branch
          %320 = sbr.rel (%p318) target = $region44
        $region43: #{tpu_custom_call.1} parent=11 // pred_region
          _
        $region44: #{tpu_custom_call.1} parent=11 // pred_fallthru
          _
        // Predicated region
        $region45: #{tpu_custom_call.1} parent=11 // pred_check
          %p321 = pneg %p235
        $region46: #{tpu_custom_call.1} parent=11 // pred_check_branch
          %323 = sbr.rel (%p321) target = $region48
        $region47: #{tpu_custom_call.1} parent=11 // pred_region
          _
        $region48: #{tpu_custom_call.1} parent=11 // pred_fallthru
          _
        // Predicated region
        $region49: #{tpu_custom_call.1} parent=11 // pred_check
          %p324 = pneg %p256
        $region50: #{tpu_custom_call.1} parent=11 // pred_check_branch
          %326 = sbr.rel (%p324) target = $region52
        $region51: #{tpu_custom_call.1} parent=11 // pred_region
          _
        $region52: #{tpu_custom_call.1} parent=11 // pred_fallthru
          _
      $region12: #{tpu_custom_call.1} parent=5 // pred_fallthru
        _
      %p327 = scmp.lt.s32.totalorder %s20, 2
      // Predicated region
      $region53: #{tpu_custom_call.1} parent=5 // pred_check
        %p328 = pneg %p327
      $region54: #{tpu_custom_call.1} parent=5 // pred_check_branch
        %330 = sbr.rel (%p328) target = $region56
      $region55: #{tpu_custom_call.1} parent=5 // pred_region
        // Predicated region
        $region57: #{tpu_custom_call.1} parent=55 // pred_check
          %p331 = pneg %p40
        $region58: #{tpu_custom_call.1} parent=55 // pred_check_branch
          %333 = sbr.rel (%p331) target = $region60
        $region59: #{tpu_custom_call.1} parent=55 // pred_region
          %p334 = scmp.lt.s32.totalorder %s20, 1
          %s335 = scalar_select %p334, %s20, 1
          %s336 = smul.addr %s335, 8
          %s337 = scalar_lea.vmem %s0, %s336
        $region60: #{tpu_custom_call.1} parent=55 // pred_fallthru
          _
      $region56: #{tpu_custom_call.1} parent=5 // pred_fallthru
        _
      %p338 = scmp.le.s32.totalorder 1, %s20
      %p339 = scmp.lt.s32.totalorder %s20, 3
      %p340 = pnand %p338, %p339
      %p341 = pneg %p340
      // Predicated region
      $region61: #{tpu_custom_call.1} parent=5 // pred_check
        _
      $region62: #{tpu_custom_call.1} parent=5 // pred_check_branch
        %343 = sbr.rel (%p340) target = $region64
      $region63: #{tpu_custom_call.1} parent=5 // pred_region
        %s344 = ssub.s32 %s20, 1
        %p345 = scmp.lt.s32.totalorder %s25, 1
        %s346 = scalar_select %p345, %s25, 1
        %s347 = smul.addr %s346, 8
        %s348 = scalar_lea.vmem %s0, %s347
        %p349 = pneg %p46
        %p350 = pneg %p43
        %p351 = pneg %p67
        %p352 = pneg %p64
        %p353 = pneg %p88
        %p354 = pneg %p85
        %p355 = pneg %p109
        %p356 = pneg %p106
        %p357 = pneg %p130
        %p358 = pneg %p127
        %p359 = pneg %p151
        %p360 = pneg %p148
        %p361 = pneg %p172
        %p362 = pneg %p169
        %p363 = pneg %p193
        %p364 = pneg %p190
        %p365 = pneg %p214
        %p366 = pneg %p211
        %p367 = pneg %p235
        %p368 = pneg %p232
        %p369 = pneg %p256
        %p370 = pneg %p253
        %p371 = pneg %p282
        %p372 = pneg %p279
        %s373 = sand.u32 %s269, 1
        %s374 = scalar_lea.sflag [#allocation3], %s373
        %s375 = sand.u32 %s269, 1
        %s376 = smul.addr %s375, 8
        %s377 = scalar_lea.vmem [#allocation2], %s376
        %p378 = scmp.lt.s32.totalorder %s25, 1
        %s379 = scalar_select %p378, %s25, 1
        %s380 = smul.addr %s379, 8
        %s381 = scalar_lea.vmem %s0, %s380
        %v382 = vld [vmem:[%s381] sm:$0xff]
        %v383 = vmin.f32 %v382, 512.0
        %v384 = vld [vmem:[%s1] sm:$0x1]
        %386 = vset.pattern.permute.xlu0 0
        %387 = vperm.xlu0 %386, %v383
        %v388 = vpop.permute.xlu0 %387
        %v391 = vlaneseq
        %v392 = vshrl.u32 %v391, 7
        %v393 = vsub.s32 0, %v392
        %v394 = vrot.slane %v384, %v393
        %v396 = vmul.f32 %v388, %v394
        %v397 = vld [vmem:[%s2] sm:$0x1]
        %v399 = vlaneseq
        %v400 = vshrl.u32 %v399, 7
        %v401 = vsub.s32 0, %v400
        %v402 = vrot.slane %v397, %v401
        %v404 = vadd.f32 %v396, %v402
        %v405 = vmax.f32 %v404, 0.0
        %v406 = vld [vmem:[%s3] sm:$0xff]
        %v407 = vld [vmem:[%s3 + $0x8] sm:$0xff]
        %v408 = vld [vmem:[%s3 + $0x10] sm:$0xff]
        %v409 = vld [vmem:[%s3 + $0x18] sm:$0xff]
        %v410 = vld [vmem:[%s4] sm:$0x1]
        %v412 = vlaneseq
        %v413 = vshrl.u32 %v412, 7
        %v414 = vsub.s32 0, %v413
        %v415 = vrot.slane %v410, %v414
        %vm417 = vcmask 261120
        %v419 = vsel %vm417, %v405, 0
        %421 = vmatprep.subr.mxu0 0.0
        %422 = vmatpush1.msra.mxu0 %v406
        %423 = vmatprep.subr.mxu0 0.0
        %424 = vmatpush1.msra.mxu0 %v407
        %425 = vmatprep.subr.mxu0 0.0
        %426 = vmatpush1.msra.mxu0 %v408
        %427 = vmatprep.subr.mxu0 0.0
        %428 = vmatpush1.msra.mxu0 %v409
        %429 = vmatprep.subr.mxu0 0.0
        %430 = vmatpush1.msra.mxu0 0.0
        %431 = vmatprep.subr.mxu0 0.0
        %432 = vmatpush1.msra.mxu0 0.0
        %433 = vmatprep.subr.mxu0 0.0
        %434 = vmatpush1.msra.mxu0 0.0
        %435 = vmatprep.subr.mxu0 0.0
        %436 = vmatpush1.msra.mxu0 0.0
        %437 = vmatprep.subr.mxu0 0.0
        %438 = vmatpush1.msra.mxu0 0.0
        %439 = vmatprep.subr.mxu0 0.0
        %440 = vmatpush1.msra.mxu0 0.0
        %441 = vmatprep.subr.mxu0 0.0
        %442 = vmatpush1.msra.mxu0 0.0
        %443 = vmatprep.subr.mxu0 0.0
        %444 = vmatpush1.msra.mxu0 0.0
        %445 = vmatprep.subr.mxu0 0.0
        %446 = vmatpush1.msra.mxu0 0.0
        %447 = vmatprep.subr.mxu0 0.0
        %448 = vmatpush1.msra.mxu0 0.0
        %449 = vmatprep.subr.mxu0 0.0
        %450 = vmatpush1.msra.mxu0 0.0
        %451 = vmatprep.subr.mxu0 0.0
        %452 = vmatpush1.msra.mxu0 0.0
        %453 = vmatprep.subr.mxu0 0.0
        %454 = vmatpush1.msra.mxu0 0.0
        %455 = vmatprep.subr.mxu0 0.0
        %456 = vmatpush1.msra.mxu0 0.0
        %457 = vmatprep.subr.mxu0 0.0
        %458 = vmatpush1.msra.mxu0 0.0
        %459 = vmatprep.subr.mxu0 0.0
        %460 = vmatpush1.msra.mxu0 0.0
        %461 = vmatprep.subr.mxu0 0.0
        %462 = vmatpush1.msra.mxu0 0.0
        %463 = vmatprep.subr.mxu0 0.0
        %464 = vmatpush1.msra.mxu0 0.0
        %465 = vmatprep.subr.mxu0 0.0
        %466 = vmatpush1.msra.mxu0 0.0
        %467 = vmatprep.subr.mxu0 0.0
        %468 = vmatpush1.msra.mxu0 0.0
        %469 = vmatprep.subr.mxu0 0.0
        %470 = vmatpush1.msra.mxu0 0.0
        %471 = vmatprep.subr.mxu0 0.0
        %472 = vmatpush1.msra.mxu0 0.0
        %473 = vmatprep.subr.mxu0 0.0
        %474 = vmatpush1.msra.mxu0 0.0
        %475 = vmatprep.subr.mxu0 0.0
        %476 = vmatpush1.msra.mxu0 0.0
        %477 = vmatprep.subr.mxu0 0.0
        %478 = vmatpush1.msra.mxu0 0.0
        %479 = vmatprep.subr.mxu0 0.0
        %480 = vmatpush1.msra.mxu0 0.0
        %481 = vmatprep.subr.mxu0 0.0
        %482 = vmatpush1.msra.mxu0 0.0
        %483 = vmatprep.subr.mxu0 0.0
        %484 = vmatpush1.msra.mxu0 0.0
        %485 = vmatprep.mubr.f32.mxu0 0.0
        %486 = vmatmul.mubr.f32.gmra.mrb[0].mxu0 %v419
        %v487 = vpop.f32.mrb[0].mxu0
        %v488 = vadd.f32 %v415, %v487
        %v489 = vpop.f32.mrb[0].mxu0
        %490 = vdwg.mxu0
        %v491 = vsel %vm417, %v488, 0.0
        %492 = vadd.xlane.f32.xlu0 %v491
        %v493 = vpop.xlane.xlu0 %492
        %v494 = vrcp.pop 32.0
        %v495 = vmul.f32 %v493, %v494
        %v496 = vsub.f32 %v488, %v495
        %v497 = vmul.f32 %v496, %v496
        %v498 = vsel %vm417, %v497, 0.0
        %499 = vadd.xlane.f32.xlu0 %v498
        %v500 = vpop.xlane.xlu0 %499
        %v501 = vmul.f32 %v500, %v494
        %v502 = vadd.f32 %v501, 1e-05
        %v503 = vrsqrt.pop %v502
        %v504 = vmul.f32 %v496, %v503
        %v505 = vld [vmem:[%s5] sm:$0x1]
        %v507 = vlaneseq
        %v508 = vshrl.u32 %v507, 7
        %v509 = vsub.s32 0, %v508
        %v510 = vrot.slane %v505, %v509
        %v512 = vmul.f32 %v504, %v510
        %v513 = vld [vmem:[%s6] sm:$0x1]
        %v515 = vlaneseq
        %v516 = vshrl.u32 %v515, 7
        %v517 = vsub.s32 0, %v516
        %v518 = vrot.slane %v513, %v517
        %v520 = vadd.f32 %v512, %v518
        %v521 = vld [vmem:[%s7] sm:$0xff]
        %v522 = vld [vmem:[%s7 + $0x8] sm:$0xff]
        %v523 = vld [vmem:[%s7 + $0x10] sm:$0xff]
        %v524 = vld [vmem:[%s7 + $0x18] sm:$0xff]
        %v525 = vld [vmem:[%s8] sm:$0x1]
        %v527 = vlaneseq
        %v528 = vshrl.u32 %v527, 7
        %v529 = vsub.s32 0, %v528
        %v530 = vrot.slane %v525, %v529
        %v533 = vsel %vm417, %v520, 0
        %535 = vmatprep.subr.mxu0 0.0
        %536 = vmatpush1.msra.mxu0 %v521
        %537 = vmatprep.subr.mxu0 0.0
        %538 = vmatpush1.msra.mxu0 %v522
        %539 = vmatprep.subr.mxu0 0.0
        %540 = vmatpush1.msra.mxu0 %v523
        %541 = vmatprep.subr.mxu0 0.0
        %542 = vmatpush1.msra.mxu0 %v524
        %543 = vmatprep.subr.mxu0 0.0
        %544 = vmatpush1.msra.mxu0 0.0
        %545 = vmatprep.subr.mxu0 0.0
        %546 = vmatpush1.msra.mxu0 0.0
        %547 = vmatprep.subr.mxu0 0.0
        %548 = vmatpush1.msra.mxu0 0.0
        %549 = vmatprep.subr.mxu0 0.0
        %550 = vmatpush1.msra.mxu0 0.0
        %551 = vmatprep.subr.mxu0 0.0
        %552 = vmatpush1.msra.mxu0 0.0
        %553 = vmatprep.subr.mxu0 0.0
        %554 = vmatpush1.msra.mxu0 0.0
        %555 = vmatprep.subr.mxu0 0.0
        %556 = vmatpush1.msra.mxu0 0.0
        %557 = vmatprep.subr.mxu0 0.0
        %558 = vmatpush1.msra.mxu0 0.0
        %559 = vmatprep.subr.mxu0 0.0
        %560 = vmatpush1.msra.mxu0 0.0
        %561 = vmatprep.subr.mxu0 0.0
        %562 = vmatpush1.msra.mxu0 0.0
        %563 = vmatprep.subr.mxu0 0.0
        %564 = vmatpush1.msra.mxu0 0.0
        %565 = vmatprep.subr.mxu0 0.0
        %566 = vmatpush1.msra.mxu0 0.0
        %567 = vmatprep.subr.mxu0 0.0
        %568 = vmatpush1.msra.mxu0 0.0
        %569 = vmatprep.subr.mxu0 0.0
        %570 = vmatpush1.msra.mxu0 0.0
        %571 = vmatprep.subr.mxu0 0.0
        %572 = vmatpush1.msra.mxu0 0.0
        %573 = vmatprep.subr.mxu0 0.0
        %574 = vmatpush1.msra.mxu0 0.0
        %575 = vmatprep.subr.mxu0 0.0
        %576 = vmatpush1.msra.mxu0 0.0
        %577 = vmatprep.subr.mxu0 0.0
        %578 = vmatpush1.msra.mxu0 0.0
        %579 = vmatprep.subr.mxu0 0.0
        %580 = vmatpush1.msra.mxu0 0.0
        %581 = vmatprep.subr.mxu0 0.0
        %582 = vmatpush1.msra.mxu0 0.0
        %583 = vmatprep.subr.mxu0 0.0
        %584 = vmatpush1.msra.mxu0 0.0
        %585 = vmatprep.subr.mxu0 0.0
        %586 = vmatpush1.msra.mxu0 0.0
        %587 = vmatprep.subr.mxu0 0.0
        %588 = vmatpush1.msra.mxu0 0.0
        %589 = vmatprep.subr.mxu0 0.0
        %590 = vmatpush1.msra.mxu0 0.0
        %591 = vmatprep.subr.mxu0 0.0
        %592 = vmatpush1.msra.mxu0 0.0
        %593 = vmatprep.subr.mxu0 0.0
        %594 = vmatpush1.msra.mxu0 0.0
        %595 = vmatprep.subr.mxu0 0.0
        %596 = vmatpush1.msra.mxu0 0.0
        %597 = vmatprep.subr.mxu0 0.0
        %598 = vmatpush1.msra.mxu0 0.0
        %599 = vmatprep.mubr.f32.mxu0 0.0
        %600 = vmatmul.mubr.f32.gmra.mrb[0].mxu0 %v533
        %v601 = vpop.f32.mrb[0].mxu0
        %v602 = vadd.f32 %v530, %v601
        %v603 = vpop.f32.mrb[0].mxu0
        %604 = vdwg.mxu0
        %v605 = vmul.f32 %v602, 0.5
        %v606 = vmul.f32 %v602, 0.70710677
        %v607 = verf.f32.pop %v606
        %v608 = vadd.f32 %v607, 1.0
        %v609 = vmul.f32 %v605, %v608
        %v610 = vld [vmem:[%s9] sm:$0xff]
        %v611 = vld [vmem:[%s10] sm:$0x1]
        %v613 = vlaneseq
        %v614 = vshrl.u32 %v613, 7
        %v615 = vsub.s32 0, %v614
        %v616 = vrot.slane %v611, %v615
        %vm618 = vcmask 64512
        %v620 = vsel %vm618, %v609, 0
        %622 = vmatprep.subr.mxu0 0.0
        %623 = vmatpush1.msra.mxu0 %v610
        %624 = vmatprep.subr.mxu0 0.0
        %625 = vmatpush1.msra.mxu0 0.0
        %626 = vmatprep.subr.mxu0 0.0
        %627 = vmatpush1.msra.mxu0 0.0
        %628 = vmatprep.subr.mxu0 0.0
        %629 = vmatpush1.msra.mxu0 0.0
        %630 = vmatprep.subr.mxu0 0.0
        %631 = vmatpush1.msra.mxu0 0.0
        %632 = vmatprep.subr.mxu0 0.0
        %633 = vmatpush1.msra.mxu0 0.0
        %634 = vmatprep.subr.mxu0 0.0
        %635 = vmatpush1.msra.mxu0 0.0
        %636 = vmatprep.subr.mxu0 0.0
        %637 = vmatpush1.msra.mxu0 0.0
        %638 = vmatprep.subr.mxu0 0.0
        %639 = vmatpush1.msra.mxu0 0.0
        %640 = vmatprep.subr.mxu0 0.0
        %641 = vmatpush1.msra.mxu0 0.0
        %642 = vmatprep.subr.mxu0 0.0
        %643 = vmatpush1.msra.mxu0 0.0
        %644 = vmatprep.subr.mxu0 0.0
        %645 = vmatpush1.msra.mxu0 0.0
        %646 = vmatprep.subr.mxu0 0.0
        %647 = vmatpush1.msra.mxu0 0.0
        %648 = vmatprep.subr.mxu0 0.0
        %649 = vmatpush1.msra.mxu0 0.0
        %650 = vmatprep.subr.mxu0 0.0
        %651 = vmatpush1.msra.mxu0 0.0
        %652 = vmatprep.subr.mxu0 0.0
        %653 = vmatpush1.msra.mxu0 0.0
        %654 = vmatprep.subr.mxu0 0.0
        %655 = vmatpush1.msra.mxu0 0.0
        %656 = vmatprep.subr.mxu0 0.0
        %657 = vmatpush1.msra.mxu0 0.0
        %658 = vmatprep.subr.mxu0 0.0
        %659 = vmatpush1.msra.mxu0 0.0
        %660 = vmatprep.subr.mxu0 0.0
        %661 = vmatpush1.msra.mxu0 0.0
        %662 = vmatprep.subr.mxu0 0.0
        %663 = vmatpush1.msra.mxu0 0.0
        %664 = vmatprep.subr.mxu0 0.0
        %665 = vmatpush1.msra.mxu0 0.0
        %666 = vmatprep.subr.mxu0 0.0
        %667 = vmatpush1.msra.mxu0 0.0
        %668 = vmatprep.subr.mxu0 0.0
        %669 = vmatpush1.msra.mxu0 0.0
        %670 = vmatprep.subr.mxu0 0.0
        %671 = vmatpush1.msra.mxu0 0.0
        %672 = vmatprep.subr.mxu0 0.0
        %673 = vmatpush1.msra.mxu0 0.0
        %674 = vmatprep.subr.mxu0 0.0
        %675 = vmatpush1.msra.mxu0 0.0
        %676 = vmatprep.subr.mxu0 0.0
        %677 = vmatpush1.msra.mxu0 0.0
        %678 = vmatprep.subr.mxu0 0.0
        %679 = vmatpush1.msra.mxu0 0.0
        %680 = vmatprep.subr.mxu0 0.0
        %681 = vmatpush1.msra.mxu0 0.0
        %682 = vmatprep.subr.mxu0 0.0
        %683 = vmatpush1.msra.mxu0 0.0
        %684 = vmatprep.subr.mxu0 0.0
        %685 = vmatpush1.msra.mxu0 0.0
        %686 = vmatprep.mubr.f32.mxu0 0.0
        %687 = vmatmul.mubr.f32.gmra.mrb[0].mxu0 %v620
        %v688 = vpop.f32.mrb[0].mxu0
        %v689 = vadd.f32 %v616, %v688
        %v690 = vpop.f32.mrb[0].mxu0
        %691 = vdwg.mxu0
        %v692 = vadd.f32 %v520, %v689
        %693 = vst.msk [vmem:[%s377] sm:$0xff] %vm417, %v692
        %s694 = sand.u32 %s269, 1
        %s695 = scalar_lea.sflag [#allocation3], %s694
        %s696 = sand.u32 %s269, 1
        %s697 = smul.addr %s696, 8
        %s698 = scalar_lea.vmem [#allocation2], %s697
        // Predicated region
        $region65: #{tpu_custom_call.1} parent=63 // pred_check
          %p699 = pneg %p279
        $region66: #{tpu_custom_call.1} parent=63 // pred_check_branch
          %701 = sbr.rel (%p699) target = $region68
        $region67: #{tpu_custom_call.1} parent=63 // pred_region
          %s703 = ssub.s32 128, 128
          %704 = vsyncadd %s695, %s703
          %s705 = smul.addr %s25, 128
          %s706 = scalar_lea.hbm %s11, %s705
          %s708 = sshll.u32 %s698, 4
          %s709 = int_to_ptr.vmem [resolvable:$true] %s708
          %711 = dma.vmem_to_hbm [thread:$0]  %s709, 128, %s706, %s695
        $region68: #{tpu_custom_call.1} parent=63 // pred_fallthru
          _
      $region64: #{tpu_custom_call.1} parent=5 // pred_fallthru
        _
      %p712 = scmp.le.s32.totalorder 2, %s20
      // Predicated region
      $region69: #{tpu_custom_call.1} parent=5 // pred_check
        %p713 = pneg %p712
      $region70: #{tpu_custom_call.1} parent=5 // pred_check_branch
        %715 = sbr.rel (%p713) target = $region72
      $region71: #{tpu_custom_call.1} parent=5 // pred_region
        %s716 = ssub.s32 %s20, 2
        // Predicated region
        $region73: #{tpu_custom_call.1} parent=71 // pred_check
          %p717 = pneg %p285
        $region74: #{tpu_custom_call.1} parent=71 // pred_check_branch
          %719 = sbr.rel (%p717) target = $region76
        $region75: #{tpu_custom_call.1} parent=71 // pred_region
          %s720 = sand.u32 %s270, 1
          %s721 = scalar_lea.sflag [#allocation3], %s720
          %s722 = sand.u32 %s270, 1
          %s723 = smul.addr %s722, 8
          %s724 = scalar_lea.vmem [#allocation2], %s723
          %725 = dma.done %s721, 128
        $region76: #{tpu_custom_call.1} parent=71 // pred_fallthru
          _
      $region72: #{tpu_custom_call.1} parent=5 // pred_fallthru
        _
    $region6: #{tpu_custom_call.1} parent=1 // loop_footer
      %s24 = sadd.s32 1, %s20
    $region7: #{tpu_custom_call.1} parent=1 // loop_footer_branch
      %19 = sbr.rel target = $region3
    $region8: #{tpu_custom_call.1} parent=1 // loop_exit
      _
    %726 = vsyncpa [#allocation3], 1
    %s727 = scalar_lea.sflag [#allocation3], 1
    %728 = vsyncpa %s727, 1

// kernel: tpu_custom_call.1
$region0: #{tpu_custom_call.1}
  #allocation0 [shape = 'u32[]', space=smem, size = 0x4, offset = 0x4, fixed_abs, tag = 'smem constant byte address 0x4 - core index']
  #allocation1 [shape = 'u32[144,128]{1,0:T(1,128)}', space=vmem, size = 0x12000, scoped, tag = 'internal scratch']
  %s0 = inlined_call_operand.vmem [shape: f32[16,1], index: 0, kind: input, shape index: {}]
  %s1 = inlined_call_operand.vmem [shape: f32[1,32], index: 1, kind: input, shape index: {}]
  %s2 = inlined_call_operand.vmem [shape: f32[1,32], index: 2, kind: input, shape index: {}]
  %s3 = inlined_call_operand.vmem [shape: f32[32,32], index: 3, kind: input, shape index: {}]
  %s4 = inlined_call_operand.vmem [shape: f32[1,32], index: 4, kind: input, shape index: {}]
  %s5 = inlined_call_operand.vmem [shape: f32[1,32], index: 5, kind: input, shape index: {}]
  %s6 = inlined_call_operand.vmem [shape: f32[1,32], index: 6, kind: input, shape index: {}]
  %s7 = inlined_call_operand.vmem [shape: f32[32,8], index: 7, kind: input, shape index: {}]
  %s8 = inlined_call_operand.vmem [shape: f32[1,8], index: 8, kind: input, shape index: {}]
  %s9 = inlined_call_operand.vmem [shape: f32[8,32], index: 9, kind: input, shape index: {}]
  %s10 = inlined_call_operand.vmem [shape: f32[1,32], index: 10, kind: input, shape index: {}]
  %s11 = inlined_call_operand.hbm [shape: f32[16,32], index: 11, kind: output, shape index: {}]
  %s12 = sld [smem:[#allocation0]]
  $region77: #{tpu_custom_call.1} parent=0
    _
  %s14 = ssub.s32 1, %s12
  %s15 = scalar_select 0, %s14, %s12
  $region1: #{tpu_custom_call.1} parent=0
    #allocation2 [shape = 'u8[8192]{0}', space=vmem, size = 0x2000, scoped, tag = 'output window, operand 0']
    #allocation3 [shape = 's32[2]{0}', space=sflag, size = 0x8, scoped, tag = 'scoped memory for tpu_custom_call.1']
    %16 = vsyncpa [#allocation3], 0
    %s17 = scalar_lea.sflag [#allocation3], 1
    %18 = vsyncpa %s17, 0
    loop: start=0, step=1, limit=4
    $region2: #{tpu_custom_call.1} parent=1 // loop_pre_header
      _
    $region3: #{tpu_custom_call.1} parent=1 // loop_header
      %s20 = sphi 0, %s24
      %p21 = scmp.ge.s32.totalorder %s20, 4
      %s30 = sphi 0, %s32
      %s33 = sphi 0, %s30
      %s34 = sphi 0, %s33
      %s50 = sphi 0, %s34
      %s54 = sphi 0, %s54
      %s56 = sphi 0, %s54
      %s57 = sphi 0, %s56
      %s71 = sphi 0, %s57
      %s75 = sphi 0, %s75
      %s77 = sphi 0, %s75
      %s78 = sphi 0, %s77
      %s92 = sphi 0, %s78
      %s96 = sphi 0, %s96
      %s98 = sphi 0, %s96
      %s99 = sphi 0, %s98
      %s113 = sphi 0, %s99
      %s117 = sphi 0, %s117
      %s119 = sphi 0, %s117
      %s120 = sphi 0, %s119
      %s134 = sphi 0, %s120
      %s138 = sphi 0, %s138
      %s140 = sphi 0, %s138
      %s141 = sphi 0, %s140
      %s155 = sphi 0, %s141
      %s159 = sphi 0, %s159
      %s161 = sphi 0, %s159
      %s162 = sphi 0, %s161
      %s176 = sphi 0, %s162
      %s180 = sphi 0, %s180
      %s182 = sphi 0, %s180
      %s183 = sphi 0, %s182
      %s197 = sphi 0, %s183
      %s201 = sphi 0, %s201
      %s203 = sphi 0, %s201
      %s204 = sphi 0, %s203
      %s218 = sphi 0, %s204
      %s222 = sphi 0, %s222
      %s224 = sphi 0, %s222
      %s225 = sphi 0, %s224
      %s239 = sphi 0, %s225
      %s243 = sphi 0, %s243
      %s245 = sphi 0, %s243
      %s246 = sphi 0, %s245
      %s260 = sphi 0, %s246
      %s266 = sphi 0, %s268
      %s269 = sphi 0, %s266
      %s270 = sphi 0, %s269
      %s286 = sphi 0, %s270
    $region4: #{tpu_custom_call.1} parent=1 // loop_header_branch
      %23 = sbr.rel (%p21) target = $region8
    $region5: #{tpu_custom_call.1} parent=1 // loop_body
      %s25 = ssub.s32 %s20, 1
      %s26 = ssub.s32 %s20, 2
      %s27 = sadd.s32 %s20, 1
      %s28 = ssub.s32 %s20, %s27
      %p29 = scmp.eq.s32.totalorder %s28, 0
      %s31 = sadd.s32 %s30, 1
      %s32 = scalar_select %p29, %s30, %s31
      %p35 = pneg %p29
      %p36 = scmp.eq.s32.totalorder %s20, 1
      %p37 = por %p35, %p36
      %p38 = scmp.ne.s32.totalorder %s30, %s33
      %p39 = scmp.eq.s32.totalorder %s20, 0
      %p40 = por %p38, %p39
      %p41 = scmp.ne.s32.totalorder %s30, %s33
      %p42 = scmp.eq.s32.totalorder %s25, 1
      %p43 = por %p41, %p42
      %p44 = scmp.ne.s32.totalorder %s33, %s34
      %p45 = scmp.eq.s32.totalorder %s25, 0
      %p46 = por %p44, %p45
      %p47 = scmp.ne.s32.totalorder %s33, %s34
      %p48 = scmp.eq.s32.totalorder %s26, 1
      %p49 = por %p47, %p48
      %p51 = scmp.ne.s32.totalorder %s34, %s50
      %p52 = scmp.eq.s32.totalorder %s26, 0
      %p53 = por %p51, %p52
      %s55 = sadd.s32 %s54, 1
      %p58 = scmp.eq.s32.totalorder %s20, 1
      %p59 = scmp.ne.s32.totalorder %s54, %s56
      %p60 = scmp.eq.s32.totalorder %s20, 0
      %p61 = por %p59, %p60
      %p62 = scmp.ne.s32.totalorder %s54, %s56
      %p63 = scmp.eq.s32.totalorder %s25, 1
      %p64 = por %p62, %p63
      %p65 = scmp.ne.s32.totalorder %s56, %s57
      %p66 = scmp.eq.s32.totalorder %s25, 0
      %p67 = por %p65, %p66
      %p68 = scmp.ne.s32.totalorder %s56, %s57
      %p69 = scmp.eq.s32.totalorder %s26, 1
      %p70 = por %p68, %p69
      %p72 = scmp.ne.s32.totalorder %s57, %s71
      %p73 = scmp.eq.s32.totalorder %s26, 0
      %p74 = por %p72, %p73
      %s76 = sadd.s32 %s75, 1
      %p79 = scmp.eq.s32.totalorder %s20, 1
      %p80 = scmp.ne.s32.totalorder %s75, %s77
      %p81 = scmp.eq.s32.totalorder %s20, 0
      %p82 = por %p80, %p81
      %p83 = scmp.ne.s32.totalorder %s75, %s77
      %p84 = scmp.eq.s32.totalorder %s25, 1
      %p85 = por %p83, %p84
      %p86 = scmp.ne.s32.totalorder %s77, %s78
      %p87 = scmp.eq.s32.totalorder %s25, 0
      %p88 = por %p86, %p87
      %p89 = scmp.ne.s32.totalorder %s77, %s78
      %p90 = scmp.eq.s32.totalorder %s26, 1
      %p91 = por %p89, %p90
      %p93 = scmp.ne.s32.totalorder %s78, %s92
      %p94 = scmp.eq.s32.totalorder %s26, 0
      %p95 = por %p93, %p94
      %s97 = sadd.s32 %s96, 1
      %p100 = scmp.eq.s32.totalorder %s20, 1
      %p101 = scmp.ne.s32.totalorder %s96, %s98
      %p102 = scmp.eq.s32.totalorder %s20, 0
      %p103 = por %p101, %p102
      %p104 = scmp.ne.s32.totalorder %s96, %s98
      %p105 = scmp.eq.s32.totalorder %s25, 1
      %p106 = por %p104, %p105
      %p107 = scmp.ne.s32.totalorder %s98, %s99
      %p108 = scmp.eq.s32.totalorder %s25, 0
      %p109 = por %p107, %p108
      %p110 = scmp.ne.s32.totalorder %s98, %s99
      %p111 = scmp.eq.s32.totalorder %s26, 1
      %p112 = por %p110, %p111
      %p114 = scmp.ne.s32.totalorder %s99, %s113
      %p115 = scmp.eq.s32.totalorder %s26, 0
      %p116 = por %p114, %p115
      %s118 = sadd.s32 %s117, 1
      %p121 = scmp.eq.s32.totalorder %s20, 1
      %p122 = scmp.ne.s32.totalorder %s117, %s119
      %p123 = scmp.eq.s32.totalorder %s20, 0
      %p124 = por %p122, %p123
      %p125 = scmp.ne.s32.totalorder %s117, %s119
      %p126 = scmp.eq.s32.totalorder %s25, 1
      %p127 = por %p125, %p126
      %p128 = scmp.ne.s32.totalorder %s119, %s120
      %p129 = scmp.eq.s32.totalorder %s25, 0
      %p130 = por %p128, %p129
      %p131 = scmp.ne.s32.totalorder %s119, %s120
      %p132 = scmp.eq.s32.totalorder %s26, 1
      %p133 = por %p131, %p132
      %p135 = scmp.ne.s32.totalorder %s120, %s134
      %p136 = scmp.eq.s32.totalorder %s26, 0
      %p137 = por %p135, %p136
      %s139 = sadd.s32 %s138, 1
      %p142 = scmp.eq.s32.totalorder %s20, 1
      %p143 = scmp.ne.s32.totalorder %s138, %s140
      %p144 = scmp.eq.s32.totalorder %s20, 0
      %p145 = por %p143, %p144
      %p146 = scmp.ne.s32.totalorder %s138, %s140
      %p147 = scmp.eq.s32.totalorder %s25, 1
      %p148 = por %p146, %p147
      %p149 = scmp.ne.s32.totalorder %s140, %s141
      %p150 = scmp.eq.s32.totalorder %s25, 0
      %p151 = por %p149, %p150
      %p152 = scmp.ne.s32.totalorder %s140, %s141
      %p153 = scmp.eq.s32.totalorder %s26, 1
      %p154 = por %p152, %p153
      %p156 = scmp.ne.s32.totalorder %s141, %s155
      %p157 = scmp.eq.s32.totalorder %s26, 0
      %p158 = por %p156, %p157
      %s160 = sadd.s32 %s159, 1
      %p163 = scmp.eq.s32.totalorder %s20, 1
      %p164 = scmp.ne.s32.totalorder %s159, %s161
      %p165 = scmp.eq.s32.totalorder %s20, 0
      %p166 = por %p164, %p165
      %p167 = scmp.ne.s32.totalorder %s159, %s161
      %p168 = scmp.eq.s32.totalorder %s25, 1
      %p169 = por %p167, %p168
      %p170 = scmp.ne.s32.totalorder %s161, %s162
      %p171 = scmp.eq.s32.totalorder %s25, 0
      %p172 = por %p170, %p171
      %p173 = scmp.ne.s32.totalorder %s161, %s162
      %p174 = scmp.eq.s32.totalorder %s26, 1
      %p175 = por %p173, %p174
      %p177 = scmp.ne.s32.totalorder %s162, %s176
      %p178 = scmp.eq.s32.totalorder %s26, 0
      %p179 = por %p177, %p178
      %s181 = sadd.s32 %s180, 1
      %p184 = scmp.eq.s32.totalorder %s20, 1
      %p185 = scmp.ne.s32.totalorder %s180, %s182
      %p186 = scmp.eq.s32.totalorder %s20, 0
      %p187 = por %p185, %p186
      %p188 = scmp.ne.s32.totalorder %s180, %s182
      %p189 = scmp.eq.s32.totalorder %s25, 1
      %p190 = por %p188, %p189
      %p191 = scmp.ne.s32.totalorder %s182, %s183
      %p192 = scmp.eq.s32.totalorder %s25, 0
      %p193 = por %p191, %p192
      %p194 = scmp.ne.s32.totalorder %s182, %s183
      %p195 = scmp.eq.s32.totalorder %s26, 1
      %p196 = por %p194, %p195
      %p198 = scmp.ne.s32.totalorder %s183, %s197
      %p199 = scmp.eq.s32.totalorder %s26, 0
      %p200 = por %p198, %p199
      %s202 = sadd.s32 %s201, 1
      %p205 = scmp.eq.s32.totalorder %s20, 1
      %p206 = scmp.ne.s32.totalorder %s201, %s203
      %p207 = scmp.eq.s32.totalorder %s20, 0
      %p208 = por %p206, %p207
      %p209 = scmp.ne.s32.totalorder %s201, %s203
      %p210 = scmp.eq.s32.totalorder %s25, 1
      %p211 = por %p209, %p210
      %p212 = scmp.ne.s32.totalorder %s203, %s204
      %p213 = scmp.eq.s32.totalorder %s25, 0
      %p214 = por %p212, %p213
      %p215 = scmp.ne.s32.totalorder %s203, %s204
      %p216 = scmp.eq.s32.totalorder %s26, 1
      %p217 = por %p215, %p216
      %p219 = scmp.ne.s32.totalorder %s204, %s218
      %p220 = scmp.eq.s32.totalorder %s26, 0
      %p221 = por %p219, %p220
      %s223 = sadd.s32 %s222, 1
      %p226 = scmp.eq.s32.totalorder %s20, 1
      %p227 = scmp.ne.s32.totalorder %s222, %s224
      %p228 = scmp.eq.s32.totalorder %s20, 0
      %p229 = por %p227, %p228
      %p230 = scmp.ne.s32.totalorder %s222, %s224
      %p231 = scmp.eq.s32.totalorder %s25, 1
      %p232 = por %p230, %p231
      %p233 = scmp.ne.s32.totalorder %s224, %s225
      %p234 = scmp.eq.s32.totalorder %s25, 0
      %p235 = por %p233, %p234
      %p236 = scmp.ne.s32.totalorder %s224, %s225
      %p237 = scmp.eq.s32.totalorder %s26, 1
      %p238 = por %p236, %p237
      %p240 = scmp.ne.s32.totalorder %s225, %s239
      %p241 = scmp.eq.s32.totalorder %s26, 0
      %p242 = por %p240, %p241
      %s244 = sadd.s32 %s243, 1
      %p247 = scmp.eq.s32.totalorder %s20, 1
      %p248 = scmp.ne.s32.totalorder %s243, %s245
      %p249 = scmp.eq.s32.totalorder %s20, 0
      %p250 = por %p248, %p249
      %p251 = scmp.ne.s32.totalorder %s243, %s245
      %p252 = scmp.eq.s32.totalorder %s25, 1
      %p253 = por %p251, %p252
      %p254 = scmp.ne.s32.totalorder %s245, %s246
      %p255 = scmp.eq.s32.totalorder %s25, 0
      %p256 = por %p254, %p255
      %p257 = scmp.ne.s32.totalorder %s245, %s246
      %p258 = scmp.eq.s32.totalorder %s26, 1
      %p259 = por %p257, %p258
      %p261 = scmp.ne.s32.totalorder %s246, %s260
      %p262 = scmp.eq.s32.totalorder %s26, 0
      %p263 = por %p261, %p262
      %s264 = ssub.s32 %s20, %s27
      %p265 = scmp.eq.s32.totalorder %s264, 0
      %s267 = sadd.s32 %s266, 1
      %s268 = scalar_select %p265, %s266, %s267
      %p271 = pneg %p265
      %p272 = scmp.eq.s32.totalorder %s20, 1
      %p273 = por %p271, %p272
      %p274 = scmp.ne.s32.totalorder %s266, %s269
      %p275 = scmp.eq.s32.totalorder %s20, 0
      %p276 = por %p274, %p275
      %p277 = scmp.ne.s32.totalorder %s266, %s269
      %p278 = scmp.eq.s32.totalorder %s25, 1
      %p279 = por %p277, %p278
      %p280 = scmp.ne.s32.totalorder %s269, %s270
      %p281 = scmp.eq.s32.totalorder %s25, 0
      %p282 = por %p280, %p281
      %p283 = scmp.ne.s32.totalorder %s269, %s270
      %p284 = scmp.eq.s32.totalorder %s26, 1
      %p285 = por %p283, %p284
      %p287 = scmp.ne.s32.totalorder %s270, %s286
      %p288 = scmp.eq.s32.totalorder %s26, 0
      %p289 = por %p287, %p288
      %p290 = scmp.le.s32.totalorder 1, %s20
      %p291 = scmp.lt.s32.totalorder %s20, 3
      %p292 = pnand %p290, %p291
      %p293 = pneg %p292
      // Predicated region
      $region9: #{tpu_custom_call.1} parent=5 // pred_check
        _
      $region10: #{tpu_custom_call.1} parent=5 // pred_check_branch
        %295 = sbr.rel (%p292) target = $region12
      $region11: #{tpu_custom_call.1} parent=5 // pred_region
        %s296 = ssub.s32 %s20, 1
        // Predicated region
        $region13: #{tpu_custom_call.1} parent=11 // pred_check
          %p297 = pneg %p67
        $region14: #{tpu_custom_call.1} parent=11 // pred_check_branch
          %299 = sbr.rel (%p297) target = $region16
        $region15: #{tpu_custom_call.1} parent=11 // pred_region
          _
        $region16: #{tpu_custom_call.1} parent=11 // pred_fallthru
          _
        // Predicated region
        $region17: #{tpu_custom_call.1} parent=11 // pred_check
          %p300 = pneg %p88
        $region18: #{tpu_custom_call.1} parent=11 // pred_check_branch
          %302 = sbr.rel (%p300) target = $region20
        $region19: #{tpu_custom_call.1} parent=11 // pred_region
          _
        $region20: #{tpu_custom_call.1} parent=11 // pred_fallthru
          _
        // Predicated region
        $region21: #{tpu_custom_call.1} parent=11 // pred_check
          %p303 = pneg %p109
        $region22: #{tpu_custom_call.1} parent=11 // pred_check_branch
          %305 = sbr.rel (%p303) target = $region24
        $region23: #{tpu_custom_call.1} parent=11 // pred_region
          _
        $region24: #{tpu_custom_call.1} parent=11 // pred_fallthru
          _
        // Predicated region
        $region25: #{tpu_custom_call.1} parent=11 // pred_check
          %p306 = pneg %p130
        $region26: #{tpu_custom_call.1} parent=11 // pred_check_branch
          %308 = sbr.rel (%p306) target = $region28
        $region27: #{tpu_custom_call.1} parent=11 // pred_region
          _
        $region28: #{tpu_custom_call.1} parent=11 // pred_fallthru
          _
        // Predicated region
        $region29: #{tpu_custom_call.1} parent=11 // pred_check
          %p309 = pneg %p151
        $region30: #{tpu_custom_call.1} parent=11 // pred_check_branch
          %311 = sbr.rel (%p309) target = $region32
        $region31: #{tpu_custom_call.1} parent=11 // pred_region
          _
        $region32: #{tpu_custom_call.1} parent=11 // pred_fallthru
          _
        // Predicated region
        $region33: #{tpu_custom_call.1} parent=11 // pred_check
          %p312 = pneg %p172
        $region34: #{tpu_custom_call.1} parent=11 // pred_check_branch
          %314 = sbr.rel (%p312) target = $region36
        $region35: #{tpu_custom_call.1} parent=11 // pred_region
          _
        $region36: #{tpu_custom_call.1} parent=11 // pred_fallthru
          _
        // Predicated region
        $region37: #{tpu_custom_call.1} parent=11 // pred_check
          %p315 = pneg %p193
        $region38: #{tpu_custom_call.1} parent=11 // pred_check_branch
          %317 = sbr.rel (%p315) target = $region40
        $region39: #{tpu_custom_call.1} parent=11 // pred_region
          _
        $region40: #{tpu_custom_call.1} parent=11 // pred_fallthru
          _
        // Predicated region
        $region41: #{tpu_custom_call.1} parent=11 // pred_check
          %p318 = pneg %p214
        $region42: #{tpu_custom_call.1} parent=11 // pred_check_branch
          %320 = sbr.rel (%p318) target = $region44
        $region43: #{tpu_custom_call.1} parent=11 // pred_region
          _
        $region44: #{tpu_custom_call.1} parent=11 // pred_fallthru
          _
        // Predicated region
        $region45: #{tpu_custom_call.1} parent=11 // pred_check
          %p321 = pneg %p235
        $region46: #{tpu_custom_call.1} parent=11 // pred_check_branch
          %323 = sbr.rel (%p321) target = $region48
        $region47: #{tpu_custom_call.1} parent=11 // pred_region
          _
        $region48: #{tpu_custom_call.1} parent=11 // pred_fallthru
          _
        // Predicated region
        $region49: #{tpu_custom_call.1} parent=11 // pred_check
          %p324 = pneg %p256
        $region50: #{tpu_custom_call.1} parent=11 // pred_check_branch
          %326 = sbr.rel (%p324) target = $region52
        $region51: #{tpu_custom_call.1} parent=11 // pred_region
          _
        $region52: #{tpu_custom_call.1} parent=11 // pred_fallthru
          _
      $region12: #{tpu_custom_call.1} parent=5 // pred_fallthru
        _
      %p327 = scmp.lt.s32.totalorder %s20, 2
      // Predicated region
      $region53: #{tpu_custom_call.1} parent=5 // pred_check
        %p328 = pneg %p327
      $region54: #{tpu_custom_call.1} parent=5 // pred_check_branch
        %330 = sbr.rel (%p328) target = $region56
      $region55: #{tpu_custom_call.1} parent=5 // pred_region
        // Predicated region
        $region57: #{tpu_custom_call.1} parent=55 // pred_check
          %p331 = pneg %p40
        $region58: #{tpu_custom_call.1} parent=55 // pred_check_branch
          %333 = sbr.rel (%p331) target = $region60
        $region59: #{tpu_custom_call.1} parent=55 // pred_region
          %p334 = scmp.lt.s32.totalorder %s20, 1
          %s335 = scalar_select %p334, %s20, 1
          %s336 = smul.addr %s335, 8
          %s337 = scalar_lea.vmem %s0, %s336
        $region60: #{tpu_custom_call.1} parent=55 // pred_fallthru
          _
      $region56: #{tpu_custom_call.1} parent=5 // pred_fallthru
        _
      %p338 = scmp.le.s32.totalorder 1, %s20
      %p339 = scmp.lt.s32.totalorder %s20, 3
      %p340 = pnand %p338, %p339
      %p341 = pneg %p340
      // Predicated region
      $region61: #{tpu_custom_call.1} parent=5 // pred_check
        _
      $region62: #{tpu_custom_call.1} parent=5 // pred_check_branch
        %343 = sbr.rel (%p340) target = $region64
      $region63: #{tpu_custom_call.1} parent=5 // pred_region
        %s344 = ssub.s32 %s20, 1
        %p345 = scmp.lt.s32.totalorder %s25, 1
        %s346 = scalar_select %p345, %s25, 1
        %s347 = smul.addr %s346, 8
        %s348 = scalar_lea.vmem %s0, %s347
        %p349 = pneg %p46
        %p350 = pneg %p43
        %p351 = pneg %p67
        %p352 = pneg %p64
        %p353 = pneg %p88
        %p354 = pneg %p85
        %p355 = pneg %p109
        %p356 = pneg %p106
        %p357 = pneg %p130
        %p358 = pneg %p127
        %p359 = pneg %p151
        %p360 = pneg %p148
        %p361 = pneg %p172
        %p362 = pneg %p169
        %p363 = pneg %p193
        %p364 = pneg %p190
        %p365 = pneg %p214
        %p366 = pneg %p211
        %p367 = pneg %p235
        %p368 = pneg %p232
        %p369 = pneg %p256
        %p370 = pneg %p253
        %p371 = pneg %p282
        %p372 = pneg %p279
        %s373 = sand.u32 %s269, 1
        %s374 = scalar_lea.sflag [#allocation3], %s373
        %s375 = sand.u32 %s269, 1
        %s376 = smul.addr %s375, 8
        %s377 = scalar_lea.vmem [#allocation2], %s376
        %p378 = scmp.lt.s32.totalorder %s25, 1
        %s379 = scalar_select %p378, %s25, 1
        %s380 = smul.addr %s379, 8
        %s381 = scalar_lea.vmem %s0, %s380
        %v382 = vld [vmem:[%s381] sm:$0xff]
        %v383 = vmin.f32 %v382, 512.0
        %v384 = vld [vmem:[%s1] sm:$0x1]
        %386 = vset.pattern.permute.xlu0 0
        %387 = vperm.xlu0 %386, %v383
        %v388 = vpop.permute.xlu0 %387
        %v391 = vlaneseq
        %v392 = vshrl.u32 %v391, 7
        %v393 = vsub.s32 0, %v392
        %v394 = vrot.slane %v384, %v393
        %v396 = vmul.f32 %v388, %v394
        %v397 = vld [vmem:[%s2] sm:$0x1]
        %v399 = vlaneseq
        %v400 = vshrl.u32 %v399, 7
        %v401 = vsub.s32 0, %v400
        %v402 = vrot.slane %v397, %v401
        %v404 = vadd.f32 %v396, %v402
        %v405 = vmax.f32 %v404, 0.0
        %v406 = vld [vmem:[%s3] sm:$0xff]
        %v407 = vld [vmem:[%s3 + $0x8] sm:$0xff]
        %v408 = vld [vmem:[%s3 + $0x10] sm:$0xff]
        %v409 = vld [vmem:[%s3 + $0x18] sm:$0xff]
        %v410 = vld [vmem:[%s4] sm:$0x1]
        %v412 = vlaneseq
        %v413 = vshrl.u32 %v412, 7
        %v414 = vsub.s32 0, %v413
        %v415 = vrot.slane %v410, %v414
        %vm417 = vcmask 261120
        %v419 = vsel %vm417, %v405, 0
        %421 = vmatprep.subr.mxu0 0.0
        %422 = vmatpush1.msra.mxu0 %v406
        %423 = vmatprep.subr.mxu0 0.0
        %424 = vmatpush1.msra.mxu0 %v407
        %425 = vmatprep.subr.mxu0 0.0
        %426 = vmatpush1.msra.mxu0 %v408
        %427 = vmatprep.subr.mxu0 0.0
        %428 = vmatpush1.msra.mxu0 %v409
        %429 = vmatprep.subr.mxu0 0.0
        %430 = vmatpush1.msra.mxu0 0.0
        %431 = vmatprep.subr.mxu0 0.0
        %432 = vmatpush1.msra.mxu0 0.0
        %433 = vmatprep.subr.mxu0 0.0
        %434 = vmatpush1.msra.mxu0 0.0
        %435 = vmatprep.subr.mxu0 0.0
        %436 = vmatpush1.msra.mxu0 0.0
        %437 = vmatprep.subr.mxu0 0.0
        %438 = vmatpush1.msra.mxu0 0.0
        %439 = vmatprep.subr.mxu0 0.0
        %440 = vmatpush1.msra.mxu0 0.0
        %441 = vmatprep.subr.mxu0 0.0
        %442 = vmatpush1.msra.mxu0 0.0
        %443 = vmatprep.subr.mxu0 0.0
        %444 = vmatpush1.msra.mxu0 0.0
        %445 = vmatprep.subr.mxu0 0.0
        %446 = vmatpush1.msra.mxu0 0.0
        %447 = vmatprep.subr.mxu0 0.0
        %448 = vmatpush1.msra.mxu0 0.0
        %449 = vmatprep.subr.mxu0 0.0
        %450 = vmatpush1.msra.mxu0 0.0
        %451 = vmatprep.subr.mxu0 0.0
        %452 = vmatpush1.msra.mxu0 0.0
        %453 = vmatprep.subr.mxu0 0.0
        %454 = vmatpush1.msra.mxu0 0.0
        %455 = vmatprep.subr.mxu0 0.0
        %456 = vmatpush1.msra.mxu0 0.0
        %457 = vmatprep.subr.mxu0 0.0
        %458 = vmatpush1.msra.mxu0 0.0
        %459 = vmatprep.subr.mxu0 0.0
        %460 = vmatpush1.msra.mxu0 0.0
        %461 = vmatprep.subr.mxu0 0.0
        %462 = vmatpush1.msra.mxu0 0.0
        %463 = vmatprep.subr.mxu0 0.0
        %464 = vmatpush1.msra.mxu0 0.0
        %465 = vmatprep.subr.mxu0 0.0
        %466 = vmatpush1.msra.mxu0 0.0
        %467 = vmatprep.subr.mxu0 0.0
        %468 = vmatpush1.msra.mxu0 0.0
        %469 = vmatprep.subr.mxu0 0.0
        %470 = vmatpush1.msra.mxu0 0.0
        %471 = vmatprep.subr.mxu0 0.0
        %472 = vmatpush1.msra.mxu0 0.0
        %473 = vmatprep.subr.mxu0 0.0
        %474 = vmatpush1.msra.mxu0 0.0
        %475 = vmatprep.subr.mxu0 0.0
        %476 = vmatpush1.msra.mxu0 0.0
        %477 = vmatprep.subr.mxu0 0.0
        %478 = vmatpush1.msra.mxu0 0.0
        %479 = vmatprep.subr.mxu0 0.0
        %480 = vmatpush1.msra.mxu0 0.0
        %481 = vmatprep.subr.mxu0 0.0
        %482 = vmatpush1.msra.mxu0 0.0
        %483 = vmatprep.subr.mxu0 0.0
        %484 = vmatpush1.msra.mxu0 0.0
        %485 = vmatprep.mubr.f32.mxu0 0.0
        %486 = vmatmul.mubr.f32.gmra.mrb[0].mxu0 %v419
        %v487 = vpop.f32.mrb[0].mxu0
        %v488 = vadd.f32 %v415, %v487
        %v489 = vpop.f32.mrb[0].mxu0
        %490 = vdwg.mxu0
        %v491 = vsel %vm417, %v488, 0.0
        %492 = vadd.xlane.f32.xlu0 %v491
        %v493 = vpop.xlane.xlu0 %492
        %v494 = vrcp.pop 32.0
        %v495 = vmul.f32 %v493, %v494
        %v496 = vsub.f32 %v488, %v495
        %v497 = vmul.f32 %v496, %v496
        %v498 = vsel %vm417, %v497, 0.0
        %499 = vadd.xlane.f32.xlu0 %v498
        %v500 = vpop.xlane.xlu0 %499
        %v501 = vmul.f32 %v500, %v494
        %v502 = vadd.f32 %v501, 1e-05
        %v503 = vrsqrt.pop %v502
        %v504 = vmul.f32 %v496, %v503
        %v505 = vld [vmem:[%s5] sm:$0x1]
        %v507 = vlaneseq
        %v508 = vshrl.u32 %v507, 7
        %v509 = vsub.s32 0, %v508
        %v510 = vrot.slane %v505, %v509
        %v512 = vmul.f32 %v504, %v510
        %v513 = vld [vmem:[%s6] sm:$0x1]
        %v515 = vlaneseq
        %v516 = vshrl.u32 %v515, 7
        %v517 = vsub.s32 0, %v516
        %v518 = vrot.slane %v513, %v517
        %v520 = vadd.f32 %v512, %v518
        %v521 = vld [vmem:[%s7] sm:$0xff]
        %v522 = vld [vmem:[%s7 + $0x8] sm:$0xff]
        %v523 = vld [vmem:[%s7 + $0x10] sm:$0xff]
        %v524 = vld [vmem:[%s7 + $0x18] sm:$0xff]
        %v525 = vld [vmem:[%s8] sm:$0x1]
        %v527 = vlaneseq
        %v528 = vshrl.u32 %v527, 7
        %v529 = vsub.s32 0, %v528
        %v530 = vrot.slane %v525, %v529
        %v533 = vsel %vm417, %v520, 0
        %535 = vmatprep.subr.mxu0 0.0
        %536 = vmatpush1.msra.mxu0 %v521
        %537 = vmatprep.subr.mxu0 0.0
        %538 = vmatpush1.msra.mxu0 %v522
        %539 = vmatprep.subr.mxu0 0.0
        %540 = vmatpush1.msra.mxu0 %v523
        %541 = vmatprep.subr.mxu0 0.0
        %542 = vmatpush1.msra.mxu0 %v524
        %543 = vmatprep.subr.mxu0 0.0
        %544 = vmatpush1.msra.mxu0 0.0
        %545 = vmatprep.subr.mxu0 0.0
        %546 = vmatpush1.msra.mxu0 0.0
        %547 = vmatprep.subr.mxu0 0.0
        %548 = vmatpush1.msra.mxu0 0.0
        %549 = vmatprep.subr.mxu0 0.0
        %550 = vmatpush1.msra.mxu0 0.0
        %551 = vmatprep.subr.mxu0 0.0
        %552 = vmatpush1.msra.mxu0 0.0
        %553 = vmatprep.subr.mxu0 0.0
        %554 = vmatpush1.msra.mxu0 0.0
        %555 = vmatprep.subr.mxu0 0.0
        %556 = vmatpush1.msra.mxu0 0.0
        %557 = vmatprep.subr.mxu0 0.0
        %558 = vmatpush1.msra.mxu0 0.0
        %559 = vmatprep.subr.mxu0 0.0
        %560 = vmatpush1.msra.mxu0 0.0
        %561 = vmatprep.subr.mxu0 0.0
        %562 = vmatpush1.msra.mxu0 0.0
        %563 = vmatprep.subr.mxu0 0.0
        %564 = vmatpush1.msra.mxu0 0.0
        %565 = vmatprep.subr.mxu0 0.0
        %566 = vmatpush1.msra.mxu0 0.0
        %567 = vmatprep.subr.mxu0 0.0
        %568 = vmatpush1.msra.mxu0 0.0
        %569 = vmatprep.subr.mxu0 0.0
        %570 = vmatpush1.msra.mxu0 0.0
        %571 = vmatprep.subr.mxu0 0.0
        %572 = vmatpush1.msra.mxu0 0.0
        %573 = vmatprep.subr.mxu0 0.0
        %574 = vmatpush1.msra.mxu0 0.0
        %575 = vmatprep.subr.mxu0 0.0
        %576 = vmatpush1.msra.mxu0 0.0
        %577 = vmatprep.subr.mxu0 0.0
        %578 = vmatpush1.msra.mxu0 0.0
        %579 = vmatprep.subr.mxu0 0.0
        %580 = vmatpush1.msra.mxu0 0.0
        %581 = vmatprep.subr.mxu0 0.0
        %582 = vmatpush1.msra.mxu0 0.0
        %583 = vmatprep.subr.mxu0 0.0
        %584 = vmatpush1.msra.mxu0 0.0
        %585 = vmatprep.subr.mxu0 0.0
        %586 = vmatpush1.msra.mxu0 0.0
        %587 = vmatprep.subr.mxu0 0.0
        %588 = vmatpush1.msra.mxu0 0.0
        %589 = vmatprep.subr.mxu0 0.0
        %590 = vmatpush1.msra.mxu0 0.0
        %591 = vmatprep.subr.mxu0 0.0
        %592 = vmatpush1.msra.mxu0 0.0
        %593 = vmatprep.subr.mxu0 0.0
        %594 = vmatpush1.msra.mxu0 0.0
        %595 = vmatprep.subr.mxu0 0.0
        %596 = vmatpush1.msra.mxu0 0.0
        %597 = vmatprep.subr.mxu0 0.0
        %598 = vmatpush1.msra.mxu0 0.0
        %599 = vmatprep.mubr.f32.mxu0 0.0
        %600 = vmatmul.mubr.f32.gmra.mrb[0].mxu0 %v533
        %v601 = vpop.f32.mrb[0].mxu0
        %v602 = vadd.f32 %v530, %v601
        %v603 = vpop.f32.mrb[0].mxu0
        %604 = vdwg.mxu0
        %v605 = vmul.f32 %v602, 0.5
        %v606 = vmul.f32 %v602, 0.70710677
        %v607 = verf.f32.pop %v606
        %v608 = vadd.f32 %v607, 1.0
        %v609 = vmul.f32 %v605, %v608
        %v610 = vld [vmem:[%s9] sm:$0xff]
        %v611 = vld [vmem:[%s10] sm:$0x1]
        %v613 = vlaneseq
        %v614 = vshrl.u32 %v613, 7
        %v615 = vsub.s32 0, %v614
        %v616 = vrot.slane %v611, %v615
        %vm618 = vcmask 64512
        %v620 = vsel %vm618, %v609, 0
        %622 = vmatprep.subr.mxu0 0.0
        %623 = vmatpush1.msra.mxu0 %v610
        %624 = vmatprep.subr.mxu0 0.0
        %625 = vmatpush1.msra.mxu0 0.0
        %626 = vmatprep.subr.mxu0 0.0
        %627 = vmatpush1.msra.mxu0 0.0
        %628 = vmatprep.subr.mxu0 0.0
        %629 = vmatpush1.msra.mxu0 0.0
        %630 = vmatprep.subr.mxu0 0.0
        %631 = vmatpush1.msra.mxu0 0.0
        %632 = vmatprep.subr.mxu0 0.0
        %633 = vmatpush1.msra.mxu0 0.0
        %634 = vmatprep.subr.mxu0 0.0
        %635 = vmatpush1.msra.mxu0 0.0
        %636 = vmatprep.subr.mxu0 0.0
        %637 = vmatpush1.msra.mxu0 0.0
        %638 = vmatprep.subr.mxu0 0.0
        %639 = vmatpush1.msra.mxu0 0.0
        %640 = vmatprep.subr.mxu0 0.0
        %641 = vmatpush1.msra.mxu0 0.0
        %642 = vmatprep.subr.mxu0 0.0
        %643 = vmatpush1.msra.mxu0 0.0
        %644 = vmatprep.subr.mxu0 0.0
        %645 = vmatpush1.msra.mxu0 0.0
        %646 = vmatprep.subr.mxu0 0.0
        %647 = vmatpush1.msra.mxu0 0.0
        %648 = vmatprep.subr.mxu0 0.0
        %649 = vmatpush1.msra.mxu0 0.0
        %650 = vmatprep.subr.mxu0 0.0
        %651 = vmatpush1.msra.mxu0 0.0
        %652 = vmatprep.subr.mxu0 0.0
        %653 = vmatpush1.msra.mxu0 0.0
        %654 = vmatprep.subr.mxu0 0.0
        %655 = vmatpush1.msra.mxu0 0.0
        %656 = vmatprep.subr.mxu0 0.0
        %657 = vmatpush1.msra.mxu0 0.0
        %658 = vmatprep.subr.mxu0 0.0
        %659 = vmatpush1.msra.mxu0 0.0
        %660 = vmatprep.subr.mxu0 0.0
        %661 = vmatpush1.msra.mxu0 0.0
        %662 = vmatprep.subr.mxu0 0.0
        %663 = vmatpush1.msra.mxu0 0.0
        %664 = vmatprep.subr.mxu0 0.0
        %665 = vmatpush1.msra.mxu0 0.0
        %666 = vmatprep.subr.mxu0 0.0
        %667 = vmatpush1.msra.mxu0 0.0
        %668 = vmatprep.subr.mxu0 0.0
        %669 = vmatpush1.msra.mxu0 0.0
        %670 = vmatprep.subr.mxu0 0.0
        %671 = vmatpush1.msra.mxu0 0.0
        %672 = vmatprep.subr.mxu0 0.0
        %673 = vmatpush1.msra.mxu0 0.0
        %674 = vmatprep.subr.mxu0 0.0
        %675 = vmatpush1.msra.mxu0 0.0
        %676 = vmatprep.subr.mxu0 0.0
        %677 = vmatpush1.msra.mxu0 0.0
        %678 = vmatprep.subr.mxu0 0.0
        %679 = vmatpush1.msra.mxu0 0.0
        %680 = vmatprep.subr.mxu0 0.0
        %681 = vmatpush1.msra.mxu0 0.0
        %682 = vmatprep.subr.mxu0 0.0
        %683 = vmatpush1.msra.mxu0 0.0
        %684 = vmatprep.subr.mxu0 0.0
        %685 = vmatpush1.msra.mxu0 0.0
        %686 = vmatprep.mubr.f32.mxu0 0.0
        %687 = vmatmul.mubr.f32.gmra.mrb[0].mxu0 %v620
        %v688 = vpop.f32.mrb[0].mxu0
        %v689 = vadd.f32 %v616, %v688
        %v690 = vpop.f32.mrb[0].mxu0
        %691 = vdwg.mxu0
        %v692 = vadd.f32 %v520, %v689
        %693 = vst.msk [vmem:[%s377] sm:$0xff] %vm417, %v692
        %s694 = sand.u32 %s269, 1
        %s695 = scalar_lea.sflag [#allocation3], %s694
        %s696 = sand.u32 %s269, 1
        %s697 = smul.addr %s696, 8
        %s698 = scalar_lea.vmem [#allocation2], %s697
        // Predicated region
        $region65: #{tpu_custom_call.1} parent=63 // pred_check
          %p699 = pneg %p279
        $region66: #{tpu_custom_call.1} parent=63 // pred_check_branch
          %701 = sbr.rel (%p699) target = $region68
        $region67: #{tpu_custom_call.1} parent=63 // pred_region
          %s703 = ssub.s32 128, 128
          %704 = vsyncadd %s695, %s703
          %s705 = smul.addr %s25, 128
          %s706 = scalar_lea.hbm %s11, %s705
          %s708 = sshll.u32 %s698, 4
          %s709 = int_to_ptr.vmem [resolvable:$true] %s708
          %711 = dma.vmem_to_hbm [thread:$0]  %s709, 128, %s706, %s695
        $region68: #{tpu_custom_call.1} parent=63 // pred_fallthru
          _
      $region64: #{tpu_custom_call.1} parent=5 // pred_fallthru
        _
      %p712 = scmp.le.s32.totalorder 2, %s20
      // Predicated region
      $region69: #{tpu_custom_call.1} parent=5 // pred_check
        %p713 = pneg %p712
      $region70: #{tpu_custom_call.1} parent=5 // pred_check_branch
        %715 = sbr.rel (%p713) target = $region72
      $region71: #{tpu_custom_call.1} parent=5 // pred_region
        %s716 = ssub.s32 %s20, 2
        // Predicated region
        $region73: #{tpu_custom_call.1} parent=71 // pred_check
          %p717 = pneg %p285
        $region74: #{tpu_custom_call.1} parent=71 // pred_check_branch
          %719 = sbr.rel (%p717) target = $region76
        $region75: #{tpu_custom_call.1} parent=71 // pred_region
          %s720 = sand.u32 %s270, 1
          %s721 = scalar_lea.sflag [#allocation3], %s720
          %s722 = sand.u32 %s270, 1
          %s723 = smul.addr %s722, 8
          %s724 = scalar_lea.vmem [#allocation2], %s723
          %725 = dma.done %s721, 128
        $region76: #{tpu_custom_call.1} parent=71 // pred_fallthru
          _
      $region72: #{tpu_custom_call.1} parent=5 // pred_fallthru
        _
    $region6: #{tpu_custom_call.1} parent=1 // loop_footer
      %s24 = sadd.s32 1, %s20
    $region7: #{tpu_custom_call.1} parent=1 // loop_footer_branch
      %19 = sbr.rel target = $region3
    $region8: #{tpu_custom_call.1} parent=1 // loop_exit
      _
    %726 = vsyncpa [#allocation3], 1
    %s727 = scalar_lea.sflag [#allocation3], 1
    %728 = vsyncpa %s727, 1

</llo_original>
